<compile_context>
chip_gen: v5e
topology: v5e:2x2
jax: 0.10.0
libtpu: 0.0.40
codegen_flags: <defaults>
</compile_context>

<pallas_src>
import jax
import jax.numpy as jnp
from jax import lax
from jax.experimental import pallas as pl
from jax.experimental.pallas import tpu as pltpu


def _round_up(n: int, m: int) -> int:
    return ((n + m - 1) // m) * m


def _act_fn(name: str):
    if name == "tanh":
        return jnp.tanh
    if name == "relu":
        return lambda v: jnp.maximum(v, 0.0)
    raise ValueError(f"unsupported activation: {name}")


def _make_model_kernel(*, rnn_num_layers, seq_len, fc_num_layers,
                       rnn_activation, fc_activation, compute_dtype):
    L, T = rnn_num_layers, seq_len
    r_act = _act_fn(rnn_activation)
    f_act = _act_fn(fc_activation)
    cdt = compute_dtype

    def kernel(x1_ref, x2_ref, wih0_ref, whh0_ref, wcat_ref, brnn_ref,
               wr_ref, br_ref, w1_ref, b1_ref, wf_ref, bf_ref,
               w2_ref, b2_ref, o_ref, proj_ref):
        tb = x1_ref.shape[1]            # batch tile (per branch)
        tb2 = 2 * tb                    # both siamese branches stacked along sublanes
        hp = whh0_ref.shape[-1]         # padded rnn hidden

        # ---- Phase 1: hoisted layer-0 input projection for BOTH branches ----
        # (off the serial recurrence chain; just independent K=D_in GEMMs)
        wih0 = wih0_ref[...]
        b0 = jnp.broadcast_to(brnn_ref[0], (tb2, hp))   # layer-0 bias, hoisted broadcast

        def proj_body(t, carry):
            p1 = jnp.dot(x1_ref[t], wih0, preferred_element_type=jnp.float32)
            p2 = jnp.dot(x2_ref[t], wih0, preferred_element_type=jnp.float32)
            proj_ref[t] = jnp.concatenate([p1, p2], axis=0) + b0
            return carry

        lax.fori_loop(0, T, proj_body, 0, unroll=(T if T <= 8 else 4))

        # ---- Phase 2: serial recurrence (branches interleaved, bf16 carries) ----
        whh0 = whh0_ref[...]
        wcat = [wcat_ref[l - 1] for l in range(1, L)]                     # (2*hp, hp) each
        b_rest = [jnp.broadcast_to(brnn_ref[l], (tb2, hp)) for l in range(1, L)]

        h_init = tuple(jnp.zeros((tb2, hp), cdt) for _ in range(L))

        def step(t, hs):
            # layer 0: input projection already precomputed (bias folded in)
            z0 = jnp.dot(hs[0], whh0, preferred_element_type=jnp.float32) + proj_ref[t]
            h0 = jnp.tanh(z0).astype(cdt)
            new_hs = [h0]
            inp = h0
            for l in range(1, L):                      # static layer loop, K=2*hp fused
                cat = jnp.concatenate([inp, hs[l]], axis=1)       # (tb2, 2*hp)
                z = jnp.dot(cat, wcat[l - 1], preferred_element_type=jnp.float32)
                hl = jnp.tanh(z + b_rest[l - 1]).astype(cdt)
                new_hs.append(hl)
                inp = hl
            return tuple(new_hs)

        hs = lax.fori_loop(0, T, step, h_init, unroll=(T if T <= 8 else 8))

        # ---- Phase 3: RNN head (both branches at once), siamese combine, FCNN ----
        feat = jnp.dot(hs[L - 1], wr_ref[...], preferred_element_type=jnp.float32)
        feat = r_act(feat + br_ref[...])               # (tb2, Fp) f32
        f1 = feat[:tb]
        f2 = feat[tb:]

        diff = jnp.abs(f1 - f2)
        prod = f1 * f2
        z = jnp.concatenate([diff, prod], axis=1).astype(cdt)      # (tb, 2*Fp), K=256
        h = jnp.dot(z, w1_ref[...], preferred_element_type=jnp.float32)
        h = f_act(h + b1_ref[...])

        if fc_num_layers > 1:                          # shared fc applied (L-1) times
            wf = wf_ref[...]
            bfb = bf_ref[...]
            def fc_body(_, hh):
                zz = jnp.dot(hh.astype(cdt), wf, preferred_element_type=jnp.float32)
                return f_act(zz + bfb)
            h = lax.fori_loop(0, fc_num_layers - 1, fc_body, h, unroll=True)

        y = jnp.dot(h.astype(cdt), w2_ref[...], preferred_element_type=jnp.float32)
        o_ref[...] = (y + b2_ref[...]).astype(o_ref.dtype)

    return kernel


def model_forward(x1, x2, params, *, rnn_num_layers, rnn_activation,
                  fc_num_layers, fc_activation,
                  compute_dtype=jnp.bfloat16, block_b=None):
    """Fused forward pass of `Model`. x1, x2: (B, T, rnn_input_size) float32."""
    assert x1.shape == x2.shape and x1.ndim == 3
    B, T, D_in = x1.shape
    L = rnn_num_layers
    H = params["rnn_w_hh"][0].shape[0]
    F = params["rnn_w_r"].shape[1]
    FC_IN, FC_H = params["fc_w1"].shape
    FC_OUT = params["fc_w2"].shape[1]
    assert FC_IN == 2 * F, "fc_input_size must equal 2 * rnn_output_size"

    # Lane padding (128) for every feature dim; sublane-friendly batch tile.
    Hp = _round_up(H, 128)
    Fp = _round_up(F, 128)
    FHp = _round_up(FC_H, 128)
    OUTp = _round_up(FC_OUT, 128)

    Bp16 = _round_up(B, 16)
    if block_b is not None:
        TB = _round_up(block_b, 16)
    else:
        TB = min(64 if L >= 2 else 128, Bp16)          # modest default -> no carry spills
        if Bp16 // TB < 2 and Bp16 >= 32:              # expose >=2 grid steps (v7x megacore,
            TB = _round_up(Bp16 // 2, 16)              #  input DMA pipelining)
    Bp = _round_up(B, TB)
    n_b = Bp // TB
    wdt = compute_dtype
    # NOTE: proj scratch is (T, 2*TB, Hp) f32; for very long sequences reduce block_b.

    def pad2(a, rows, cols):
        return jnp.pad(a, ((0, rows - a.shape[0]), (0, cols - a.shape[1])))

    def padb(b, cols):                 # 1-D bias -> (1, cols) float32
        return jnp.pad(b, (0, cols - b.shape[0]))[None, :].astype(jnp.float32)

    def prep_x(x):                     # (B, T, D) -> (T, Bp, D) in compute dtype
        x = jnp.pad(x, ((0, Bp - B), (0, 0), (0, 0)))
        return jnp.transpose(x, (1, 0, 2)).astype(wdt)

    x1p, x2p = prep_x(x1), prep_x(x2)

    wih0 = pad2(params["rnn_w_ih"][0], D_in, Hp).astype(wdt)          # layer-0 input proj
    whh0 = pad2(params["rnn_w_hh"][0], Hp, Hp).astype(wdt)            # layer-0 recurrent
    if L > 1:                                                          # layers 1..L-1 fused
        wcat = jnp.stack([
            jnp.concatenate([pad2(params["rnn_w_ih"][l], Hp, Hp),
                             pad2(params["rnn_w_hh"][l], Hp, Hp)], axis=0)
            for l in range(1, L)]).astype(wdt)                         # (L-1, 2*Hp, Hp)
    else:
        wcat = jnp.zeros((1, 8, 128), wdt)                             # dummy; never read
    brnn = jnp.stack([padb(params["rnn_b_ih"][l] + params["rnn_b_hh"][l], Hp)
                      for l in range(L)])                              # (L, 1, Hp) f32
    wr = pad2(params["rnn_w_r"], Hp, Fp).astype(wdt)
    br = padb(params["rnn_b_r"], Fp)
    w1 = jnp.concatenate([pad2(params["fc_w1"][:F], Fp, FHp),          # |diff| half
                          pad2(params["fc_w1"][F:], Fp, FHp)],         # prod half
                         axis=0).astype(wdt)                           # (2*Fp, FHp)
    b1 = padb(params["fc_b1"], FHp)
    wf = pad2(params["fc_wf"], FHp, FHp).astype(wdt)
    bf = padb(params["fc_bf"], FHp)
    w2 = pad2(params["fc_w2"], FHp, OUTp).astype(wdt)
    b2 = padb(params["fc_b2"], OUTp)

    kernel = _make_model_kernel(
        rnn_num_layers=L, seq_len=T, fc_num_layers=fc_num_layers,
        rnn_activation=rnn_activation, fc_activation=fc_activation,
        compute_dtype=wdt)

    const2 = lambda i: (0, 0)
    const3 = lambda i: (0, 0, 0)
    grid_spec = pltpu.PrefetchScalarGridSpec(
        num_scalar_prefetch=0,
        grid=(n_b,),
        in_specs=[
            pl.BlockSpec((T, TB, D_in), lambda i: (0, i, 0)),   # x1 (batch-tiled)
            pl.BlockSpec((T, TB, D_in), lambda i: (0, i, 0)),   # x2 (batch-tiled)
            pl.BlockSpec(wih0.shape, const2),                   # W_ih layer 0
            pl.BlockSpec(whh0.shape, const2),                   # W_hh layer 0
            pl.BlockSpec(wcat.shape, const3),                   # [W_ih; W_hh] layers 1..L-1
            pl.BlockSpec(brnn.shape, const3),                   # b_ih + b_hh (stacked)
            pl.BlockSpec(wr.shape, const2),                     # RNN head fc W
            pl.BlockSpec(br.shape, const2),                     # RNN head fc b
            pl.BlockSpec(w1.shape, const2),                     # FCNN fc1 W (stacked halves)
            pl.BlockSpec(b1.shape, const2),                     # fc1 b
            pl.BlockSpec(wf.shape, const2),                     # shared fc W
            pl.BlockSpec(bf.shape, const2),                     # shared fc b
            pl.BlockSpec(w2.shape, const2),                     # fc2 W
            pl.BlockSpec(b2.shape, const2),                     # fc2 b
        ],
        out_specs=pl.BlockSpec((TB, OUTp), lambda i: (i, 0)),   # lane-dense output
        scratch_shapes=[pltpu.VMEM((T, 2 * TB, Hp), jnp.float32)],  # hoisted layer-0 proj
    )

    args = (x1p, x2p, wih0, whh0, wcat, brnn, wr, br, w1, b1, wf, bf, w2, b2)

    per_row_rnn = T * (D_in * Hp + Hp * Hp + (L - 1) * 2 * Hp * Hp) + Hp * Fp
    fcnn_mm = 2 * Fp * FHp + (fc_num_layers - 1) * FHp * FHp + FHp * OUTp
    flops = 2 * (2 * Bp * per_row_rnn + Bp * fcnn_mm)
    transcendentals = (2 * Bp * (T * L * Hp + (Fp if rnn_activation == "tanh" else 0))
                       + Bp * (fc_num_layers * FHp if fc_activation == "tanh" else 0))
    bytes_accessed = sum(int(a.size) * a.dtype.itemsize for a in args) + Bp * OUTp * 4

    out = pl.pallas_call(
        kernel,
        out_shape=jax.ShapeDtypeStruct((Bp, OUTp), jnp.float32),
        grid_spec=grid_spec,
        compiler_params=pltpu.CompilerParams(
            dimension_semantics=("parallel",),
            vmem_limit_bytes=32 * 1024 * 1024,
        ),
        cost_estimate=pl.CostEstimate(
            flops=int(flops), transcendentals=int(transcendentals),
            bytes_accessed=int(bytes_accessed)),
    )(*args)

    out = out[:B, :FC_OUT]
    if FC_OUT == 1:                    # mirrors x.squeeze(1) in the original module
        out = out[:, 0]
    return out


def init_model_params(key, *, rnn_input_size, rnn_hidden_size, rnn_num_layers,
                      rnn_output_size, fc_input_size, fc_hidden_size, fc_output_size):
    """PyTorch-style U(-1/sqrt(fan), 1/sqrt(fan)) init; weights stored as [in, out]."""
    assert fc_input_size == 2 * rnn_output_size
    H, L = rnn_hidden_size, rnn_num_layers
    keys = iter(jax.random.split(key, 4 * L + 2 + 6))

    def uni(shape, bound):
        return jax.random.uniform(next(keys), shape, jnp.float32, -bound, bound)

    rb = 1.0 / (H ** 0.5)
    rnn_w_ih, rnn_w_hh, rnn_b_ih, rnn_b_hh = [], [], [], []
    for l in range(L):
        in_dim = rnn_input_size if l == 0 else H
        rnn_w_ih.append(uni((in_dim, H), rb))
        rnn_w_hh.append(uni((H, H), rb))
        rnn_b_ih.append(uni((H,), rb))
        rnn_b_hh.append(uni((H,), rb))
    rnn_w_r = uni((H, rnn_output_size), rb)
    rnn_b_r = uni((rnn_output_size,), rb)

    b_in = 1.0 / (fc_input_size ** 0.5)
    b_h = 1.0 / (fc_hidden_size ** 0.5)
    return dict(
        rnn_w_ih=rnn_w_ih, rnn_w_hh=rnn_w_hh, rnn_b_ih=rnn_b_ih, rnn_b_hh=rnn_b_hh,
        rnn_w_r=rnn_w_r, rnn_b_r=rnn_b_r,
        fc_w1=uni((fc_input_size, fc_hidden_size), b_in),
        fc_b1=uni((fc_hidden_size,), b_in),
        fc_wf=uni((fc_hidden_size, fc_hidden_size), b_h),
        fc_bf=uni((fc_hidden_size,), b_h),
        fc_w2=uni((fc_hidden_size, fc_output_size), b_h),
        fc_b2=uni((fc_output_size,), b_h),
    )


def model_reference(x1, x2, params, *, rnn_activation, fc_activation,
                    fc_num_layers, compute_dtype=None):
    """Pure-JAX reference. compute_dtype=None -> exact f32 (HIGHEST precision);
    compute_dtype=jnp.bfloat16 -> mimic the kernel's bf16-operand / f32-accum math."""
    r_act = _act_fn(rnn_activation)
    f_act = _act_fn(fc_activation)
    if compute_dtype is None:
        dot = lambda a, b: jnp.dot(a, b, precision=lax.Precision.HIGHEST)
    else:
        dot = lambda a, b: jnp.dot(a.astype(compute_dtype), b.astype(compute_dtype),
                                   preferred_element_type=jnp.float32)

    L = len(params["rnn_w_hh"])
    H = params["rnn_w_hh"][0].shape[0]

    def rnn_branch(x):
        Bq, T, _ = x.shape
        hs = [jnp.zeros((Bq, H), jnp.float32) for _ in range(L)]
        for t in range(T):
            inp = x[:, t, :]
            for l in range(L):
                z = dot(inp, params["rnn_w_ih"][l]) + dot(hs[l], params["rnn_w_hh"][l])
                z = z + params["rnn_b_ih"][l] + params["rnn_b_hh"][l]
                hs[l] = jnp.tanh(z)
                inp = hs[l]
        return r_act(dot(hs[-1], params["rnn_w_r"]) + params["rnn_b_r"])

    f1, f2 = rnn_branch(x1), rnn_branch(x2)
    x = jnp.concatenate([jnp.abs(f1 - f2), f1 * f2], axis=1)
    h = f_act(dot(x, params["fc_w1"]) + params["fc_b1"])
    for _ in range(fc_num_layers - 1):
        h = f_act(dot(h, params["fc_wf"]) + params["fc_bf"])
    y = dot(h, params["fc_w2"]) + params["fc_b2"]
    if y.shape[1] == 1:
        y = y[:, 0]
    return y


if __name__ == "__main__":
    # Small shapes consistent with the module (fc_input_size == 2 * rnn_output_size).
    B, T = 8, 8
    rnn_input_size, rnn_hidden_size, rnn_num_layers = 16, 32, 2
    rnn_output_size, rnn_activation = 16, "tanh"
    fc_input_size, fc_hidden_size, fc_output_size = 32, 32, 1
    fc_activation, fc_num_layers = "tanh", 3

    key = jax.random.PRNGKey(0)
    kx1, kx2, kp = jax.random.split(key, 3)
    x1 = jax.random.normal(kx1, (B, T, rnn_input_size), jnp.float32)
    x2 = jax.random.normal(kx2, (B, T, rnn_input_size), jnp.float32)
    params = init_model_params(
        kp, rnn_input_size=rnn_input_size, rnn_hidden_size=rnn_hidden_size,
        rnn_num_layers=rnn_num_layers, rnn_output_size=rnn_output_size,
        fc_input_size=fc_input_size, fc_hidden_size=fc_hidden_size,
        fc_output_size=fc_output_size)

    out = model_forward(
        x1, x2, params, rnn_num_layers=rnn_num_layers, rnn_activation=rnn_activation,
        fc_num_layers=fc_num_layers, fc_activation=fc_activation,
        compute_dtype=jnp.bfloat16)
    out = jax.block_until_ready(out)

    ref_bf16 = model_reference(
        x1, x2, params, rnn_activation=rnn_activation, fc_activation=fc_activation,
        fc_num_layers=fc_num_layers, compute_dtype=jnp.bfloat16)
    ref_f32 = model_reference(
        x1, x2, params, rnn_activation=rnn_activation, fc_activation=fc_activation,
        fc_num_layers=fc_num_layers, compute_dtype=None)

    assert out.shape == (B,), out.shape
    # Same arithmetic as the kernel (bf16 operands, f32 accumulation) -> tight match.
    assert jnp.allclose(out, ref_bf16, atol=5e-3, rtol=5e-3), "mismatch vs bf16 reference"
    # True f32 module semantics -> loose match (bf16 MXU operands, as advised).
    assert jnp.allclose(out, ref_f32, atol=1e-1, rtol=1e-1), "drift vs f32 reference"

    print("KERNEL_OK")
</pallas_src>

<mosaic_0001>
module attributes {stable_mosaic.version = 11 : i64} {
  func.func @kernel(%arg0: i32, %arg1: memref<8x16x16xbf16, #tpu.memory_space<vmem>>, %arg2: memref<8x16x16xbf16, #tpu.memory_space<vmem>>, %arg3: memref<16x128xbf16, #tpu.memory_space<vmem>>, %arg4: memref<128x128xbf16, #tpu.memory_space<vmem>>, %arg5: memref<1x256x128xbf16, #tpu.memory_space<vmem>>, %arg6: memref<2x1x128xf32, #tpu.memory_space<vmem>>, %arg7: memref<128x128xbf16, #tpu.memory_space<vmem>>, %arg8: memref<1x128xf32, #tpu.memory_space<vmem>>, %arg9: memref<256x128xbf16, #tpu.memory_space<vmem>>, %arg10: memref<1x128xf32, #tpu.memory_space<vmem>>, %arg11: memref<128x128xbf16, #tpu.memory_space<vmem>>, %arg12: memref<1x128xf32, #tpu.memory_space<vmem>>, %arg13: memref<128x128xbf16, #tpu.memory_space<vmem>>, %arg14: memref<1x128xf32, #tpu.memory_space<vmem>>, %arg15: memref<16x128xf32, #tpu.memory_space<vmem>>, %arg16: memref<8x32x128xf32, #tpu.memory_space<vmem>>) attributes {dimension_semantics = [#tpu.dimension_semantics<parallel>], iteration_bounds = array<i64: 1>, scalar_prefetch = 0 : i64, scratch_operands = 1 : i64, tpu.core_type = #tpu.core_type<tc>, window_params = [{transform_indices = @transform_0, window_bounds = array<i64: 8, 16, 16>}, {transform_indices = @transform_1, window_bounds = array<i64: 8, 16, 16>}, {pipeline_mode = #tpu.pipeline_mode<synchronous>, transform_indices = @transform_2, window_bounds = array<i64: 16, 128>}, {pipeline_mode = #tpu.pipeline_mode<synchronous>, transform_indices = @transform_3, window_bounds = array<i64: 128, 128>}, {pipeline_mode = #tpu.pipeline_mode<synchronous>, transform_indices = @transform_4, window_bounds = array<i64: 1, 256, 128>}, {pipeline_mode = #tpu.pipeline_mode<synchronous>, transform_indices = @transform_5, window_bounds = array<i64: 2, 1, 128>}, {pipeline_mode = #tpu.pipeline_mode<synchronous>, transform_indices = @transform_6, window_bounds = array<i64: 128, 128>}, {pipeline_mode = #tpu.pipeline_mode<synchronous>, transform_indices = @transform_7, window_bounds = array<i64: 1, 128>}, {pipeline_mode = #tpu.pipeline_mode<synchronous>, transform_indices = @transform_8, window_bounds = array<i64: 256, 128>}, {pipeline_mode = #tpu.pipeline_mode<synchronous>, transform_indices = @transform_9, window_bounds = array<i64: 1, 128>}, {pipeline_mode = #tpu.pipeline_mode<synchronous>, transform_indices = @transform_10, window_bounds = array<i64: 128, 128>}, {pipeline_mode = #tpu.pipeline_mode<synchronous>, transform_indices = @transform_11, window_bounds = array<i64: 1, 128>}, {pipeline_mode = #tpu.pipeline_mode<synchronous>, transform_indices = @transform_12, window_bounds = array<i64: 128, 128>}, {pipeline_mode = #tpu.pipeline_mode<synchronous>, transform_indices = @transform_13, window_bounds = array<i64: 1, 128>}, {transform_indices = @transform_14, window_bounds = array<i64: 16, 128>}]} {
    %c0 = arith.constant 0 : index
    %c0_0 = arith.constant 0 : index
    %0 = vector.load %arg3[%c0, %c0_0] : memref<16x128xbf16, #tpu.memory_space<vmem>>, vector<16x128xbf16>
    %c0_1 = arith.constant 0 : index
    %c0_2 = arith.constant 0 : index
    %c0_3 = arith.constant 0 : index
    %1 = vector.load %arg6[%c0_1, %c0_2, %c0_3] : memref<2x1x128xf32, #tpu.memory_space<vmem>>, vector<1x1x128xf32>
    %2 = vector.shape_cast %1 : vector<1x1x128xf32> to vector<1x128xf32>
    %3 = vector.shape_cast %2 : vector<1x128xf32> to vector<1x128xf32>
    %4 = vector.broadcast %3 : vector<1x128xf32> to vector<32x128xf32>
    %c0_i32 = arith.constant 0 : i32
    %5 = arith.index_cast %c0_i32 : i32 to index
    %c0_4 = arith.constant 0 : index
    %c0_5 = arith.constant 0 : index
    %6 = vector.load %arg1[%5, %c0_4, %c0_5] : memref<8x16x16xbf16, #tpu.memory_space<vmem>>, vector<1x16x16xbf16>
    %7 = vector.shape_cast %6 : vector<1x16x16xbf16> to vector<16x16xbf16>
    %cst = arith.constant dense<0.000000e+00> : vector<16x128xf32>
    %8 = tpu.matmul %7, %0, %cst {dimension_numbers = #tpu.dot_dimension_numbers<[1], [0], [0], [1], [0, 0, 1, 1], [], []>} : vector<16x16xbf16>, vector<16x128xbf16>, vector<16x128xf32> -> vector<16x128xf32>
    %9 = arith.index_cast %c0_i32 : i32 to index
    %c0_6 = arith.constant 0 : index
    %c0_7 = arith.constant 0 : index
    %10 = vector.load %arg2[%9, %c0_6, %c0_7] : memref<8x16x16xbf16, #tpu.memory_space<vmem>>, vector<1x16x16xbf16>
    %11 = vector.shape_cast %10 : vector<1x16x16xbf16> to vector<16x16xbf16>
    %cst_8 = arith.constant dense<0.000000e+00> : vector<16x128xf32>
    %12 = tpu.matmul %11, %0, %cst_8 {dimension_numbers = #tpu.dot_dimension_numbers<[1], [0], [0], [1], [0, 0, 1, 1], [], []>} : vector<16x16xbf16>, vector<16x128xbf16>, vector<16x128xf32> -> vector<16x128xf32>
    %13 = tpu.concatenate %8, %12 in 0 : vector<16x128xf32>, vector<16x128xf32> -> vector<32x128xf32>
    %14 = arith.addf %13, %4 : vector<32x128xf32>
    %15 = arith.index_cast %c0_i32 : i32 to index
    %c0_9 = arith.constant 0 : index
    %c0_10 = arith.constant 0 : index
    %16 = vector.load %arg16[%15, %c0_9, %c0_10] : memref<8x32x128xf32, #tpu.memory_space<vmem>>, vector<1x32x128xf32>
    %17 = vector.shape_cast %16 : vector<1x32x128xf32> to vector<32x128xf32>
    %18 = vector.shape_cast %14 : vector<32x128xf32> to vector<1x32x128xf32>
    tpu.vector_store %arg16[%15, %c0_9, %c0_10], %18 {strides = array<i32>} : memref<8x32x128xf32, #tpu.memory_space<vmem>>, vector<1x32x128xf32>,
    %c1_i32 = arith.constant 1 : i32
    %19 = arith.index_cast %c1_i32 : i32 to index
    %c0_11 = arith.constant 0 : index
    %c0_12 = arith.constant 0 : index
    %20 = vector.load %arg1[%19, %c0_11, %c0_12] : memref<8x16x16xbf16, #tpu.memory_space<vmem>>, vector<1x16x16xbf16>
    %21 = vector.shape_cast %20 : vector<1x16x16xbf16> to vector<16x16xbf16>
    %cst_13 = arith.constant dense<0.000000e+00> : vector<16x128xf32>
    %22 = tpu.matmul %21, %0, %cst_13 {dimension_numbers = #tpu.dot_dimension_numbers<[1], [0], [0], [1], [0, 0, 1, 1], [], []>} : vector<16x16xbf16>, vector<16x128xbf16>, vector<16x128xf32> -> vector<16x128xf32>
    %23 = arith.index_cast %c1_i32 : i32 to index
    %c0_14 = arith.constant 0 : index
    %c0_15 = arith.constant 0 : index
    %24 = vector.load %arg2[%23, %c0_14, %c0_15] : memref<8x16x16xbf16, #tpu.memory_space<vmem>>, vector<1x16x16xbf16>
    %25 = vector.shape_cast %24 : vector<1x16x16xbf16> to vector<16x16xbf16>
    %cst_16 = arith.constant dense<0.000000e+00> : vector<16x128xf32>
    %26 = tpu.matmul %25, %0, %cst_16 {dimension_numbers = #tpu.dot_dimension_numbers<[1], [0], [0], [1], [0, 0, 1, 1], [], []>} : vector<16x16xbf16>, vector<16x128xbf16>, vector<16x128xf32> -> vector<16x128xf32>
    %27 = tpu.concatenate %22, %26 in 0 : vector<16x128xf32>, vector<16x128xf32> -> vector<32x128xf32>
    %28 = arith.addf %27, %4 : vector<32x128xf32>
    %29 = arith.index_cast %c1_i32 : i32 to index
    %c0_17 = arith.constant 0 : index
    %c0_18 = arith.constant 0 : index
    %30 = vector.load %arg16[%29, %c0_17, %c0_18] : memref<8x32x128xf32, #tpu.memory_space<vmem>>, vector<1x32x128xf32>
    %31 = vector.shape_cast %30 : vector<1x32x128xf32> to vector<32x128xf32>
    %32 = vector.shape_cast %28 : vector<32x128xf32> to vector<1x32x128xf32>
    tpu.vector_store %arg16[%29, %c0_17, %c0_18], %32 {strides = array<i32>} : memref<8x32x128xf32, #tpu.memory_space<vmem>>, vector<1x32x128xf32>,
    %c2_i32 = arith.constant 2 : i32
    %33 = arith.index_cast %c2_i32 : i32 to index
    %c0_19 = arith.constant 0 : index
    %c0_20 = arith.constant 0 : index
    %34 = vector.load %arg1[%33, %c0_19, %c0_20] : memref<8x16x16xbf16, #tpu.memory_space<vmem>>, vector<1x16x16xbf16>
    %35 = vector.shape_cast %34 : vector<1x16x16xbf16> to vector<16x16xbf16>
    %cst_21 = arith.constant dense<0.000000e+00> : vector<16x128xf32>
    %36 = tpu.matmul %35, %0, %cst_21 {dimension_numbers = #tpu.dot_dimension_numbers<[1], [0], [0], [1], [0, 0, 1, 1], [], []>} : vector<16x16xbf16>, vector<16x128xbf16>, vector<16x128xf32> -> vector<16x128xf32>
    %37 = arith.index_cast %c2_i32 : i32 to index
    %c0_22 = arith.constant 0 : index
    %c0_23 = arith.constant 0 : index
    %38 = vector.load %arg2[%37, %c0_22, %c0_23] : memref<8x16x16xbf16, #tpu.memory_space<vmem>>, vector<1x16x16xbf16>
    %39 = vector.shape_cast %38 : vector<1x16x16xbf16> to vector<16x16xbf16>
    %cst_24 = arith.constant dense<0.000000e+00> : vector<16x128xf32>
    %40 = tpu.matmul %39, %0, %cst_24 {dimension_numbers = #tpu.dot_dimension_numbers<[1], [0], [0], [1], [0, 0, 1, 1], [], []>} : vector<16x16xbf16>, vector<16x128xbf16>, vector<16x128xf32> -> vector<16x128xf32>
    %41 = tpu.concatenate %36, %40 in 0 : vector<16x128xf32>, vector<16x128xf32> -> vector<32x128xf32>
    %42 = arith.addf %41, %4 : vector<32x128xf32>
    %43 = arith.index_cast %c2_i32 : i32 to index
    %c0_25 = arith.constant 0 : index
    %c0_26 = arith.constant 0 : index
    %44 = vector.load %arg16[%43, %c0_25, %c0_26] : memref<8x32x128xf32, #tpu.memory_space<vmem>>, vector<1x32x128xf32>
    %45 = vector.shape_cast %44 : vector<1x32x128xf32> to vector<32x128xf32>
    %46 = vector.shape_cast %42 : vector<32x128xf32> to vector<1x32x128xf32>
    tpu.vector_store %arg16[%43, %c0_25, %c0_26], %46 {strides = array<i32>} : memref<8x32x128xf32, #tpu.memory_space<vmem>>, vector<1x32x128xf32>,
    %c3_i32 = arith.constant 3 : i32
    %47 = arith.index_cast %c3_i32 : i32 to index
    %c0_27 = arith.constant 0 : index
    %c0_28 = arith.constant 0 : index
    %48 = vector.load %arg1[%47, %c0_27, %c0_28] : memref<8x16x16xbf16, #tpu.memory_space<vmem>>, vector<1x16x16xbf16>
    %49 = vector.shape_cast %48 : vector<1x16x16xbf16> to vector<16x16xbf16>
    %cst_29 = arith.constant dense<0.000000e+00> : vector<16x128xf32>
    %50 = tpu.matmul %49, %0, %cst_29 {dimension_numbers = #tpu.dot_dimension_numbers<[1], [0], [0], [1], [0, 0, 1, 1], [], []>} : vector<16x16xbf16>, vector<16x128xbf16>, vector<16x128xf32> -> vector<16x128xf32>
    %51 = arith.index_cast %c3_i32 : i32 to index
    %c0_30 = arith.constant 0 : index
    %c0_31 = arith.constant 0 : index
    %52 = vector.load %arg2[%51, %c0_30, %c0_31] : memref<8x16x16xbf16, #tpu.memory_space<vmem>>, vector<1x16x16xbf16>
    %53 = vector.shape_cast %52 : vector<1x16x16xbf16> to vector<16x16xbf16>
    %cst_32 = arith.constant dense<0.000000e+00> : vector<16x128xf32>
    %54 = tpu.matmul %53, %0, %cst_32 {dimension_numbers = #tpu.dot_dimension_numbers<[1], [0], [0], [1], [0, 0, 1, 1], [], []>} : vector<16x16xbf16>, vector<16x128xbf16>, vector<16x128xf32> -> vector<16x128xf32>
    %55 = tpu.concatenate %50, %54 in 0 : vector<16x128xf32>, vector<16x128xf32> -> vector<32x128xf32>
    %56 = arith.addf %55, %4 : vector<32x128xf32>
    %57 = arith.index_cast %c3_i32 : i32 to index
    %c0_33 = arith.constant 0 : index
    %c0_34 = arith.constant 0 : index
    %58 = vector.load %arg16[%57, %c0_33, %c0_34] : memref<8x32x128xf32, #tpu.memory_space<vmem>>, vector<1x32x128xf32>
    %59 = vector.shape_cast %58 : vector<1x32x128xf32> to vector<32x128xf32>
    %60 = vector.shape_cast %56 : vector<32x128xf32> to vector<1x32x128xf32>
    tpu.vector_store %arg16[%57, %c0_33, %c0_34], %60 {strides = array<i32>} : memref<8x32x128xf32, #tpu.memory_space<vmem>>, vector<1x32x128xf32>,
    %c4_i32 = arith.constant 4 : i32
    %61 = arith.index_cast %c4_i32 : i32 to index
    %c0_35 = arith.constant 0 : index
    %c0_36 = arith.constant 0 : index
    %62 = vector.load %arg1[%61, %c0_35, %c0_36] : memref<8x16x16xbf16, #tpu.memory_space<vmem>>, vector<1x16x16xbf16>
    %63 = vector.shape_cast %62 : vector<1x16x16xbf16> to vector<16x16xbf16>
    %cst_37 = arith.constant dense<0.000000e+00> : vector<16x128xf32>
    %64 = tpu.matmul %63, %0, %cst_37 {dimension_numbers = #tpu.dot_dimension_numbers<[1], [0], [0], [1], [0, 0, 1, 1], [], []>} : vector<16x16xbf16>, vector<16x128xbf16>, vector<16x128xf32> -> vector<16x128xf32>
    %65 = arith.index_cast %c4_i32 : i32 to index
    %c0_38 = arith.constant 0 : index
    %c0_39 = arith.constant 0 : index
    %66 = vector.load %arg2[%65, %c0_38, %c0_39] : memref<8x16x16xbf16, #tpu.memory_space<vmem>>, vector<1x16x16xbf16>
    %67 = vector.shape_cast %66 : vector<1x16x16xbf16> to vector<16x16xbf16>
    %cst_40 = arith.constant dense<0.000000e+00> : vector<16x128xf32>
    %68 = tpu.matmul %67, %0, %cst_40 {dimension_numbers = #tpu.dot_dimension_numbers<[1], [0], [0], [1], [0, 0, 1, 1], [], []>} : vector<16x16xbf16>, vector<16x128xbf16>, vector<16x128xf32> -> vector<16x128xf32>
    %69 = tpu.concatenate %64, %68 in 0 : vector<16x128xf32>, vector<16x128xf32> -> vector<32x128xf32>
    %70 = arith.addf %69, %4 : vector<32x128xf32>
    %71 = arith.index_cast %c4_i32 : i32 to index
    %c0_41 = arith.constant 0 : index
    %c0_42 = arith.constant 0 : index
    %72 = vector.load %arg16[%71, %c0_41, %c0_42] : memref<8x32x128xf32, #tpu.memory_space<vmem>>, vector<1x32x128xf32>
    %73 = vector.shape_cast %72 : vector<1x32x128xf32> to vector<32x128xf32>
    %74 = vector.shape_cast %70 : vector<32x128xf32> to vector<1x32x128xf32>
    tpu.vector_store %arg16[%71, %c0_41, %c0_42], %74 {strides = array<i32>} : memref<8x32x128xf32, #tpu.memory_space<vmem>>, vector<1x32x128xf32>,
    %c5_i32 = arith.constant 5 : i32
    %75 = arith.index_cast %c5_i32 : i32 to index
    %c0_43 = arith.constant 0 : index
    %c0_44 = arith.constant 0 : index
    %76 = vector.load %arg1[%75, %c0_43, %c0_44] : memref<8x16x16xbf16, #tpu.memory_space<vmem>>, vector<1x16x16xbf16>
    %77 = vector.shape_cast %76 : vector<1x16x16xbf16> to vector<16x16xbf16>
    %cst_45 = arith.constant dense<0.000000e+00> : vector<16x128xf32>
    %78 = tpu.matmul %77, %0, %cst_45 {dimension_numbers = #tpu.dot_dimension_numbers<[1], [0], [0], [1], [0, 0, 1, 1], [], []>} : vector<16x16xbf16>, vector<16x128xbf16>, vector<16x128xf32> -> vector<16x128xf32>
    %79 = arith.index_cast %c5_i32 : i32 to index
    %c0_46 = arith.constant 0 : index
    %c0_47 = arith.constant 0 : index
    %80 = vector.load %arg2[%79, %c0_46, %c0_47] : memref<8x16x16xbf16, #tpu.memory_space<vmem>>, vector<1x16x16xbf16>
    %81 = vector.shape_cast %80 : vector<1x16x16xbf16> to vector<16x16xbf16>
    %cst_48 = arith.constant dense<0.000000e+00> : vector<16x128xf32>
    %82 = tpu.matmul %81, %0, %cst_48 {dimension_numbers = #tpu.dot_dimension_numbers<[1], [0], [0], [1], [0, 0, 1, 1], [], []>} : vector<16x16xbf16>, vector<16x128xbf16>, vector<16x128xf32> -> vector<16x128xf32>
    %83 = tpu.concatenate %78, %82 in 0 : vector<16x128xf32>, vector<16x128xf32> -> vector<32x128xf32>
    %84 = arith.addf %83, %4 : vector<32x128xf32>
    %85 = arith.index_cast %c5_i32 : i32 to index
    %c0_49 = arith.constant 0 : index
    %c0_50 = arith.constant 0 : index
    %86 = vector.load %arg16[%85, %c0_49, %c0_50] : memref<8x32x128xf32, #tpu.memory_space<vmem>>, vector<1x32x128xf32>
    %87 = vector.shape_cast %86 : vector<1x32x128xf32> to vector<32x128xf32>
    %88 = vector.shape_cast %84 : vector<32x128xf32> to vector<1x32x128xf32>
    tpu.vector_store %arg16[%85, %c0_49, %c0_50], %88 {strides = array<i32>} : memref<8x32x128xf32, #tpu.memory_space<vmem>>, vector<1x32x128xf32>,
    %c6_i32 = arith.constant 6 : i32
    %89 = arith.index_cast %c6_i32 : i32 to index
    %c0_51 = arith.constant 0 : index
    %c0_52 = arith.constant 0 : index
    %90 = vector.load %arg1[%89, %c0_51, %c0_52] : memref<8x16x16xbf16, #tpu.memory_space<vmem>>, vector<1x16x16xbf16>
    %91 = vector.shape_cast %90 : vector<1x16x16xbf16> to vector<16x16xbf16>
    %cst_53 = arith.constant dense<0.000000e+00> : vector<16x128xf32>
    %92 = tpu.matmul %91, %0, %cst_53 {dimension_numbers = #tpu.dot_dimension_numbers<[1], [0], [0], [1], [0, 0, 1, 1], [], []>} : vector<16x16xbf16>, vector<16x128xbf16>, vector<16x128xf32> -> vector<16x128xf32>
    %93 = arith.index_cast %c6_i32 : i32 to index
    %c0_54 = arith.constant 0 : index
    %c0_55 = arith.constant 0 : index
    %94 = vector.load %arg2[%93, %c0_54, %c0_55] : memref<8x16x16xbf16, #tpu.memory_space<vmem>>, vector<1x16x16xbf16>
    %95 = vector.shape_cast %94 : vector<1x16x16xbf16> to vector<16x16xbf16>
    %cst_56 = arith.constant dense<0.000000e+00> : vector<16x128xf32>
    %96 = tpu.matmul %95, %0, %cst_56 {dimension_numbers = #tpu.dot_dimension_numbers<[1], [0], [0], [1], [0, 0, 1, 1], [], []>} : vector<16x16xbf16>, vector<16x128xbf16>, vector<16x128xf32> -> vector<16x128xf32>
    %97 = tpu.concatenate %92, %96 in 0 : vector<16x128xf32>, vector<16x128xf32> -> vector<32x128xf32>
    %98 = arith.addf %97, %4 : vector<32x128xf32>
    %99 = arith.index_cast %c6_i32 : i32 to index
    %c0_57 = arith.constant 0 : index
    %c0_58 = arith.constant 0 : index
    %100 = vector.load %arg16[%99, %c0_57, %c0_58] : memref<8x32x128xf32, #tpu.memory_space<vmem>>, vector<1x32x128xf32>
    %101 = vector.shape_cast %100 : vector<1x32x128xf32> to vector<32x128xf32>
    %102 = vector.shape_cast %98 : vector<32x128xf32> to vector<1x32x128xf32>
    tpu.vector_store %arg16[%99, %c0_57, %c0_58], %102 {strides = array<i32>} : memref<8x32x128xf32, #tpu.memory_space<vmem>>, vector<1x32x128xf32>,
    %c7_i32 = arith.constant 7 : i32
    %103 = arith.index_cast %c7_i32 : i32 to index
    %c0_59 = arith.constant 0 : index
    %c0_60 = arith.constant 0 : index
    %104 = vector.load %arg1[%103, %c0_59, %c0_60] : memref<8x16x16xbf16, #tpu.memory_space<vmem>>, vector<1x16x16xbf16>
    %105 = vector.shape_cast %104 : vector<1x16x16xbf16> to vector<16x16xbf16>
    %cst_61 = arith.constant dense<0.000000e+00> : vector<16x128xf32>
    %106 = tpu.matmul %105, %0, %cst_61 {dimension_numbers = #tpu.dot_dimension_numbers<[1], [0], [0], [1], [0, 0, 1, 1], [], []>} : vector<16x16xbf16>, vector<16x128xbf16>, vector<16x128xf32> -> vector<16x128xf32>
    %107 = arith.index_cast %c7_i32 : i32 to index
    %c0_62 = arith.constant 0 : index
    %c0_63 = arith.constant 0 : index
    %108 = vector.load %arg2[%107, %c0_62, %c0_63] : memref<8x16x16xbf16, #tpu.memory_space<vmem>>, vector<1x16x16xbf16>
    %109 = vector.shape_cast %108 : vector<1x16x16xbf16> to vector<16x16xbf16>
    %cst_64 = arith.constant dense<0.000000e+00> : vector<16x128xf32>
    %110 = tpu.matmul %109, %0, %cst_64 {dimension_numbers = #tpu.dot_dimension_numbers<[1], [0], [0], [1], [0, 0, 1, 1], [], []>} : vector<16x16xbf16>, vector<16x128xbf16>, vector<16x128xf32> -> vector<16x128xf32>
    %111 = tpu.concatenate %106, %110 in 0 : vector<16x128xf32>, vector<16x128xf32> -> vector<32x128xf32>
    %112 = arith.addf %111, %4 : vector<32x128xf32>
    %113 = arith.index_cast %c7_i32 : i32 to index
    %c0_65 = arith.constant 0 : index
    %c0_66 = arith.constant 0 : index
    %114 = vector.load %arg16[%113, %c0_65, %c0_66] : memref<8x32x128xf32, #tpu.memory_space<vmem>>, vector<1x32x128xf32>
    %115 = vector.shape_cast %114 : vector<1x32x128xf32> to vector<32x128xf32>
    %116 = vector.shape_cast %112 : vector<32x128xf32> to vector<1x32x128xf32>
    tpu.vector_store %arg16[%113, %c0_65, %c0_66], %116 {strides = array<i32>} : memref<8x32x128xf32, #tpu.memory_space<vmem>>, vector<1x32x128xf32>,
    %c8_i32 = arith.constant 8 : i32
    %c0_67 = arith.constant 0 : index
    %c0_68 = arith.constant 0 : index
    %117 = vector.load %arg4[%c0_67, %c0_68] : memref<128x128xbf16, #tpu.memory_space<vmem>>, vector<128x128xbf16>
    %c0_69 = arith.constant 0 : index
    %c0_70 = arith.constant 0 : index
    %c0_71 = arith.constant 0 : index
    %118 = vector.load %arg5[%c0_69, %c0_70, %c0_71] : memref<1x256x128xbf16, #tpu.memory_space<vmem>>, vector<1x256x128xbf16>
    %119 = vector.shape_cast %118 : vector<1x256x128xbf16> to vector<256x128xbf16>
    %c1 = arith.constant 1 : index
    %c0_72 = arith.constant 0 : index
    %c0_73 = arith.constant 0 : index
    %120 = vector.load %arg6[%c1, %c0_72, %c0_73] : memref<2x1x128xf32, #tpu.memory_space<vmem>>, vector<1x1x128xf32>
    %121 = vector.shape_cast %120 : vector<1x1x128xf32> to vector<1x128xf32>
    %122 = vector.shape_cast %121 : vector<1x128xf32> to vector<1x128xf32>
    %123 = vector.broadcast %122 : vector<1x128xf32> to vector<32x128xf32>
    %cst_74 = arith.constant 0.000000e+00 : bf16
    %124 = vector.broadcast %cst_74 : bf16 to vector<32x128xbf16>
    %cst_75 = arith.constant 0.000000e+00 : bf16
    %125 = vector.broadcast %cst_75 : bf16 to vector<32x128xbf16>
    %c0_i32_76 = arith.constant 0 : i32
    %cst_77 = arith.constant dense<0.000000e+00> : vector<32x128xf32>
    %126 = tpu.matmul %124, %117, %cst_77 {dimension_numbers = #tpu.dot_dimension_numbers<[1], [0], [0], [1], [0, 0, 1, 1], [], []>} : vector<32x128xbf16>, vector<128x128xbf16>, vector<32x128xf32> -> vector<32x128xf32>
    %127 = arith.index_cast %c0_i32_76 : i32 to index
    %c0_78 = arith.constant 0 : index
    %c0_79 = arith.constant 0 : index
    %128 = vector.load %arg16[%127, %c0_78, %c0_79] : memref<8x32x128xf32, #tpu.memory_space<vmem>>, vector<1x32x128xf32>
    %129 = vector.shape_cast %128 : vector<1x32x128xf32> to vector<32x128xf32>
    %130 = arith.addf %126, %129 : vector<32x128xf32>
    %131 = math.tanh %130 : vector<32x128xf32>
    %132 = arith.truncf %131 : vector<32x128xf32> to vector<32x128xbf16>
    %133 = tpu.concatenate %132, %125 in 1 : vector<32x128xbf16>, vector<32x128xbf16> -> vector<32x256xbf16>
    %cst_80 = arith.constant dense<0.000000e+00> : vector<32x128xf32>
    %134 = tpu.matmul %133, %119, %cst_80 {dimension_numbers = #tpu.dot_dimension_numbers<[1], [0], [0], [1], [0, 0, 1, 1], [], []>} : vector<32x256xbf16>, vector<256x128xbf16>, vector<32x128xf32> -> vector<32x128xf32>
    %135 = arith.addf %134, %123 : vector<32x128xf32>
    %136 = math.tanh %135 : vector<32x128xf32>
    %137 = arith.truncf %136 : vector<32x128xf32> to vector<32x128xbf16>
    %c1_i32_81 = arith.constant 1 : i32
    %cst_82 = arith.constant dense<0.000000e+00> : vector<32x128xf32>
    %138 = tpu.matmul %132, %117, %cst_82 {dimension_numbers = #tpu.dot_dimension_numbers<[1], [0], [0], [1], [0, 0, 1, 1], [], []>} : vector<32x128xbf16>, vector<128x128xbf16>, vector<32x128xf32> -> vector<32x128xf32>
    %139 = arith.index_cast %c1_i32_81 : i32 to index
    %c0_83 = arith.constant 0 : index
    %c0_84 = arith.constant 0 : index
    %140 = vector.load %arg16[%139, %c0_83, %c0_84] : memref<8x32x128xf32, #tpu.memory_space<vmem>>, vector<1x32x128xf32>
    %141 = vector.shape_cast %140 : vector<1x32x128xf32> to vector<32x128xf32>
    %142 = arith.addf %138, %141 : vector<32x128xf32>
    %143 = math.tanh %142 : vector<32x128xf32>
    %144 = arith.truncf %143 : vector<32x128xf32> to vector<32x128xbf16>
    %145 = tpu.concatenate %144, %137 in 1 : vector<32x128xbf16>, vector<32x128xbf16> -> vector<32x256xbf16>
    %cst_85 = arith.constant dense<0.000000e+00> : vector<32x128xf32>
    %146 = tpu.matmul %145, %119, %cst_85 {dimension_numbers = #tpu.dot_dimension_numbers<[1], [0], [0], [1], [0, 0, 1, 1], [], []>} : vector<32x256xbf16>, vector<256x128xbf16>, vector<32x128xf32> -> vector<32x128xf32>
    %147 = arith.addf %146, %123 : vector<32x128xf32>
    %148 = math.tanh %147 : vector<32x128xf32>
    %149 = arith.truncf %148 : vector<32x128xf32> to vector<32x128xbf16>
    %c2_i32_86 = arith.constant 2 : i32
    %cst_87 = arith.constant dense<0.000000e+00> : vector<32x128xf32>
    %150 = tpu.matmul %144, %117, %cst_87 {dimension_numbers = #tpu.dot_dimension_numbers<[1], [0], [0], [1], [0, 0, 1, 1], [], []>} : vector<32x128xbf16>, vector<128x128xbf16>, vector<32x128xf32> -> vector<32x128xf32>
    %151 = arith.index_cast %c2_i32_86 : i32 to index
    %c0_88 = arith.constant 0 : index
    %c0_89 = arith.constant 0 : index
    %152 = vector.load %arg16[%151, %c0_88, %c0_89] : memref<8x32x128xf32, #tpu.memory_space<vmem>>, vector<1x32x128xf32>
    %153 = vector.shape_cast %152 : vector<1x32x128xf32> to vector<32x128xf32>
    %154 = arith.addf %150, %153 : vector<32x128xf32>
    %155 = math.tanh %154 : vector<32x128xf32>
    %156 = arith.truncf %155 : vector<32x128xf32> to vector<32x128xbf16>
    %157 = tpu.concatenate %156, %149 in 1 : vector<32x128xbf16>, vector<32x128xbf16> -> vector<32x256xbf16>
    %cst_90 = arith.constant dense<0.000000e+00> : vector<32x128xf32>
    %158 = tpu.matmul %157, %119, %cst_90 {dimension_numbers = #tpu.dot_dimension_numbers<[1], [0], [0], [1], [0, 0, 1, 1], [], []>} : vector<32x256xbf16>, vector<256x128xbf16>, vector<32x128xf32> -> vector<32x128xf32>
    %159 = arith.addf %158, %123 : vector<32x128xf32>
    %160 = math.tanh %159 : vector<32x128xf32>
    %161 = arith.truncf %160 : vector<32x128xf32> to vector<32x128xbf16>
    %c3_i32_91 = arith.constant 3 : i32
    %cst_92 = arith.constant dense<0.000000e+00> : vector<32x128xf32>
    %162 = tpu.matmul %156, %117, %cst_92 {dimension_numbers = #tpu.dot_dimension_numbers<[1], [0], [0], [1], [0, 0, 1, 1], [], []>} : vector<32x128xbf16>, vector<128x128xbf16>, vector<32x128xf32> -> vector<32x128xf32>
    %163 = arith.index_cast %c3_i32_91 : i32 to index
    %c0_93 = arith.constant 0 : index
    %c0_94 = arith.constant 0 : index
    %164 = vector.load %arg16[%163, %c0_93, %c0_94] : memref<8x32x128xf32, #tpu.memory_space<vmem>>, vector<1x32x128xf32>
    %165 = vector.shape_cast %164 : vector<1x32x128xf32> to vector<32x128xf32>
    %166 = arith.addf %162, %165 : vector<32x128xf32>
    %167 = math.tanh %166 : vector<32x128xf32>
    %168 = arith.truncf %167 : vector<32x128xf32> to vector<32x128xbf16>
    %169 = tpu.concatenate %168, %161 in 1 : vector<32x128xbf16>, vector<32x128xbf16> -> vector<32x256xbf16>
    %cst_95 = arith.constant dense<0.000000e+00> : vector<32x128xf32>
    %170 = tpu.matmul %169, %119, %cst_95 {dimension_numbers = #tpu.dot_dimension_numbers<[1], [0], [0], [1], [0, 0, 1, 1], [], []>} : vector<32x256xbf16>, vector<256x128xbf16>, vector<32x128xf32> -> vector<32x128xf32>
    %171 = arith.addf %170, %123 : vector<32x128xf32>
    %172 = math.tanh %171 : vector<32x128xf32>
    %173 = arith.truncf %172 : vector<32x128xf32> to vector<32x128xbf16>
    %c4_i32_96 = arith.constant 4 : i32
    %cst_97 = arith.constant dense<0.000000e+00> : vector<32x128xf32>
    %174 = tpu.matmul %168, %117, %cst_97 {dimension_numbers = #tpu.dot_dimension_numbers<[1], [0], [0], [1], [0, 0, 1, 1], [], []>} : vector<32x128xbf16>, vector<128x128xbf16>, vector<32x128xf32> -> vector<32x128xf32>
    %175 = arith.index_cast %c4_i32_96 : i32 to index
    %c0_98 = arith.constant 0 : index
    %c0_99 = arith.constant 0 : index
    %176 = vector.load %arg16[%175, %c0_98, %c0_99] : memref<8x32x128xf32, #tpu.memory_space<vmem>>, vector<1x32x128xf32>
    %177 = vector.shape_cast %176 : vector<1x32x128xf32> to vector<32x128xf32>
    %178 = arith.addf %174, %177 : vector<32x128xf32>
    %179 = math.tanh %178 : vector<32x128xf32>
    %180 = arith.truncf %179 : vector<32x128xf32> to vector<32x128xbf16>
    %181 = tpu.concatenate %180, %173 in 1 : vector<32x128xbf16>, vector<32x128xbf16> -> vector<32x256xbf16>
    %cst_100 = arith.constant dense<0.000000e+00> : vector<32x128xf32>
    %182 = tpu.matmul %181, %119, %cst_100 {dimension_numbers = #tpu.dot_dimension_numbers<[1], [0], [0], [1], [0, 0, 1, 1], [], []>} : vector<32x256xbf16>, vector<256x128xbf16>, vector<32x128xf32> -> vector<32x128xf32>
    %183 = arith.addf %182, %123 : vector<32x128xf32>
    %184 = math.tanh %183 : vector<32x128xf32>
    %185 = arith.truncf %184 : vector<32x128xf32> to vector<32x128xbf16>
    %c5_i32_101 = arith.constant 5 : i32
    %cst_102 = arith.constant dense<0.000000e+00> : vector<32x128xf32>
    %186 = tpu.matmul %180, %117, %cst_102 {dimension_numbers = #tpu.dot_dimension_numbers<[1], [0], [0], [1], [0, 0, 1, 1], [], []>} : vector<32x128xbf16>, vector<128x128xbf16>, vector<32x128xf32> -> vector<32x128xf32>
    %187 = arith.index_cast %c5_i32_101 : i32 to index
    %c0_103 = arith.constant 0 : index
    %c0_104 = arith.constant 0 : index
    %188 = vector.load %arg16[%187, %c0_103, %c0_104] : memref<8x32x128xf32, #tpu.memory_space<vmem>>, vector<1x32x128xf32>
    %189 = vector.shape_cast %188 : vector<1x32x128xf32> to vector<32x128xf32>
    %190 = arith.addf %186, %189 : vector<32x128xf32>
    %191 = math.tanh %190 : vector<32x128xf32>
    %192 = arith.truncf %191 : vector<32x128xf32> to vector<32x128xbf16>
    %193 = tpu.concatenate %192, %185 in 1 : vector<32x128xbf16>, vector<32x128xbf16> -> vector<32x256xbf16>
    %cst_105 = arith.constant dense<0.000000e+00> : vector<32x128xf32>
    %194 = tpu.matmul %193, %119, %cst_105 {dimension_numbers = #tpu.dot_dimension_numbers<[1], [0], [0], [1], [0, 0, 1, 1], [], []>} : vector<32x256xbf16>, vector<256x128xbf16>, vector<32x128xf32> -> vector<32x128xf32>
    %195 = arith.addf %194, %123 : vector<32x128xf32>
    %196 = math.tanh %195 : vector<32x128xf32>
    %197 = arith.truncf %196 : vector<32x128xf32> to vector<32x128xbf16>
    %c6_i32_106 = arith.constant 6 : i32
    %cst_107 = arith.constant dense<0.000000e+00> : vector<32x128xf32>
    %198 = tpu.matmul %192, %117, %cst_107 {dimension_numbers = #tpu.dot_dimension_numbers<[1], [0], [0], [1], [0, 0, 1, 1], [], []>} : vector<32x128xbf16>, vector<128x128xbf16>, vector<32x128xf32> -> vector<32x128xf32>
    %199 = arith.index_cast %c6_i32_106 : i32 to index
    %c0_108 = arith.constant 0 : index
    %c0_109 = arith.constant 0 : index
    %200 = vector.load %arg16[%199, %c0_108, %c0_109] : memref<8x32x128xf32, #tpu.memory_space<vmem>>, vector<1x32x128xf32>
    %201 = vector.shape_cast %200 : vector<1x32x128xf32> to vector<32x128xf32>
    %202 = arith.addf %198, %201 : vector<32x128xf32>
    %203 = math.tanh %202 : vector<32x128xf32>
    %204 = arith.truncf %203 : vector<32x128xf32> to vector<32x128xbf16>
    %205 = tpu.concatenate %204, %197 in 1 : vector<32x128xbf16>, vector<32x128xbf16> -> vector<32x256xbf16>
    %cst_110 = arith.constant dense<0.000000e+00> : vector<32x128xf32>
    %206 = tpu.matmul %205, %119, %cst_110 {dimension_numbers = #tpu.dot_dimension_numbers<[1], [0], [0], [1], [0, 0, 1, 1], [], []>} : vector<32x256xbf16>, vector<256x128xbf16>, vector<32x128xf32> -> vector<32x128xf32>
    %207 = arith.addf %206, %123 : vector<32x128xf32>
    %208 = math.tanh %207 : vector<32x128xf32>
    %209 = arith.truncf %208 : vector<32x128xf32> to vector<32x128xbf16>
    %c7_i32_111 = arith.constant 7 : i32
    %cst_112 = arith.constant dense<0.000000e+00> : vector<32x128xf32>
    %210 = tpu.matmul %204, %117, %cst_112 {dimension_numbers = #tpu.dot_dimension_numbers<[1], [0], [0], [1], [0, 0, 1, 1], [], []>} : vector<32x128xbf16>, vector<128x128xbf16>, vector<32x128xf32> -> vector<32x128xf32>
    %211 = arith.index_cast %c7_i32_111 : i32 to index
    %c0_113 = arith.constant 0 : index
    %c0_114 = arith.constant 0 : index
    %212 = vector.load %arg16[%211, %c0_113, %c0_114] : memref<8x32x128xf32, #tpu.memory_space<vmem>>, vector<1x32x128xf32>
    %213 = vector.shape_cast %212 : vector<1x32x128xf32> to vector<32x128xf32>
    %214 = arith.addf %210, %213 : vector<32x128xf32>
    %215 = math.tanh %214 : vector<32x128xf32>
    %216 = arith.truncf %215 : vector<32x128xf32> to vector<32x128xbf16>
    %217 = tpu.concatenate %216, %209 in 1 : vector<32x128xbf16>, vector<32x128xbf16> -> vector<32x256xbf16>
    %cst_115 = arith.constant dense<0.000000e+00> : vector<32x128xf32>
    %218 = tpu.matmul %217, %119, %cst_115 {dimension_numbers = #tpu.dot_dimension_numbers<[1], [0], [0], [1], [0, 0, 1, 1], [], []>} : vector<32x256xbf16>, vector<256x128xbf16>, vector<32x128xf32> -> vector<32x128xf32>
    %219 = arith.addf %218, %123 : vector<32x128xf32>
    %220 = math.tanh %219 : vector<32x128xf32>
    %221 = arith.truncf %220 : vector<32x128xf32> to vector<32x128xbf16>
    %c8_i32_116 = arith.constant 8 : i32
    %c0_117 = arith.constant 0 : index
    %c0_118 = arith.constant 0 : index
    %222 = vector.load %arg7[%c0_117, %c0_118] : memref<128x128xbf16, #tpu.memory_space<vmem>>, vector<128x128xbf16>
    %cst_119 = arith.constant dense<0.000000e+00> : vector<32x128xf32>
    %223 = tpu.matmul %221, %222, %cst_119 {dimension_numbers = #tpu.dot_dimension_numbers<[1], [0], [0], [1], [0, 0, 1, 1], [], []>} : vector<32x128xbf16>, vector<128x128xbf16>, vector<32x128xf32> -> vector<32x128xf32>
    %c0_120 = arith.constant 0 : index
    %c0_121 = arith.constant 0 : index
    %224 = vector.load %arg8[%c0_120, %c0_121] : memref<1x128xf32, #tpu.memory_space<vmem>>, vector<1x128xf32>
    %225 = vector.broadcast %224 : vector<1x128xf32> to vector<32x128xf32>
    %226 = arith.addf %223, %225 : vector<32x128xf32>
    %227 = math.tanh %226 : vector<32x128xf32>
    %228 = vector.extract_strided_slice %227 {offsets = [0, 0], sizes = [16, 128], strides = [1, 1]} : vector<32x128xf32> to vector<16x128xf32>
    %229 = vector.extract_strided_slice %227 {offsets = [16, 0], sizes = [16, 128], strides = [1, 1]} : vector<32x128xf32> to vector<16x128xf32>
    %230 = arith.subf %228, %229 : vector<16x128xf32>
    %231 = math.absf %230 : vector<16x128xf32>
    %232 = arith.mulf %228, %229 : vector<16x128xf32>
    %233 = tpu.concatenate %231, %232 in 1 : vector<16x128xf32>, vector<16x128xf32> -> vector<16x256xf32>
    %234 = arith.truncf %233 : vector<16x256xf32> to vector<16x256xbf16>
    %c0_122 = arith.constant 0 : index
    %c0_123 = arith.constant 0 : index
    %235 = vector.load %arg9[%c0_122, %c0_123] : memref<256x128xbf16, #tpu.memory_space<vmem>>, vector<256x128xbf16>
    %cst_124 = arith.constant dense<0.000000e+00> : vector<16x128xf32>
    %236 = tpu.matmul %234, %235, %cst_124 {dimension_numbers = #tpu.dot_dimension_numbers<[1], [0], [0], [1], [0, 0, 1, 1], [], []>} : vector<16x256xbf16>, vector<256x128xbf16>, vector<16x128xf32> -> vector<16x128xf32>
    %c0_125 = arith.constant 0 : index
    %c0_126 = arith.constant 0 : index
    %237 = vector.load %arg10[%c0_125, %c0_126] : memref<1x128xf32, #tpu.memory_space<vmem>>, vector<1x128xf32>
    %238 = vector.broadcast %237 : vector<1x128xf32> to vector<16x128xf32>
    %239 = arith.addf %236, %238 : vector<16x128xf32>
    %240 = math.tanh %239 : vector<16x128xf32>
    %c0_127 = arith.constant 0 : index
    %c0_128 = arith.constant 0 : index
    %241 = vector.load %arg11[%c0_127, %c0_128] : memref<128x128xbf16, #tpu.memory_space<vmem>>, vector<128x128xbf16>
    %c0_129 = arith.constant 0 : index
    %c0_130 = arith.constant 0 : index
    %242 = vector.load %arg12[%c0_129, %c0_130] : memref<1x128xf32, #tpu.memory_space<vmem>>, vector<1x128xf32>
    %c0_i32_131 = arith.constant 0 : i32
    %243 = arith.truncf %240 : vector<16x128xf32> to vector<16x128xbf16>
    %cst_132 = arith.constant dense<0.000000e+00> : vector<16x128xf32>
    %244 = tpu.matmul %243, %241, %cst_132 {dimension_numbers = #tpu.dot_dimension_numbers<[1], [0], [0], [1], [0, 0, 1, 1], [], []>} : vector<16x128xbf16>, vector<128x128xbf16>, vector<16x128xf32> -> vector<16x128xf32>
    %245 = vector.broadcast %242 : vector<1x128xf32> to vector<16x128xf32>
    %246 = arith.addf %244, %245 : vector<16x128xf32>
    %247 = math.tanh %246 : vector<16x128xf32>
    %c1_i32_133 = arith.constant 1 : i32
    %248 = arith.truncf %247 : vector<16x128xf32> to vector<16x128xbf16>
    %cst_134 = arith.constant dense<0.000000e+00> : vector<16x128xf32>
    %249 = tpu.matmul %248, %241, %cst_134 {dimension_numbers = #tpu.dot_dimension_numbers<[1], [0], [0], [1], [0, 0, 1, 1], [], []>} : vector<16x128xbf16>, vector<128x128xbf16>, vector<16x128xf32> -> vector<16x128xf32>
    %250 = vector.broadcast %242 : vector<1x128xf32> to vector<16x128xf32>
    %251 = arith.addf %249, %250 : vector<16x128xf32>
    %252 = math.tanh %251 : vector<16x128xf32>
    %253 = arith.truncf %252 : vector<16x128xf32> to vector<16x128xbf16>
    %c0_135 = arith.constant 0 : index
    %c0_136 = arith.constant 0 : index
    %254 = vector.load %arg13[%c0_135, %c0_136] : memref<128x128xbf16, #tpu.memory_space<vmem>>, vector<128x128xbf16>
    %cst_137 = arith.constant dense<0.000000e+00> : vector<16x128xf32>
    %255 = tpu.matmul %253, %254, %cst_137 {dimension_numbers = #tpu.dot_dimension_numbers<[1], [0], [0], [1], [0, 0, 1, 1], [], []>} : vector<16x128xbf16>, vector<128x128xbf16>, vector<16x128xf32> -> vector<16x128xf32>
    %c0_138 = arith.constant 0 : index
    %c0_139 = arith.constant 0 : index
    %256 = vector.load %arg14[%c0_138, %c0_139] : memref<1x128xf32, #tpu.memory_space<vmem>>, vector<1x128xf32>
    %257 = vector.broadcast %256 : vector<1x128xf32> to vector<16x128xf32>
    %258 = arith.addf %255, %257 : vector<16x128xf32>
    %c0_140 = arith.constant 0 : index
    %c0_141 = arith.constant 0 : index
    %259 = vector.load %arg15[%c0_140, %c0_141] : memref<16x128xf32, #tpu.memory_space<vmem>>, vector<16x128xf32>
    tpu.vector_store %arg15[%c0_140, %c0_141], %258 {strides = array<i32>} : memref<16x128xf32, #tpu.memory_space<vmem>>, vector<16x128xf32>,
    return
  }
  func.func @transform_0(%arg0: i32) -> (i32, i32, i32) {
    %c0_i32 = arith.constant 0 : i32
    %c0_i32_0 = arith.constant 0 : i32
    %c0_i32_1 = arith.constant 0 : i32
    return %c0_i32, %arg0, %c0_i32_0 : i32, i32, i32
  }
  func.func @transform_1(%arg0: i32) -> (i32, i32, i32) {
    %c0_i32 = arith.constant 0 : i32
    %c0_i32_0 = arith.constant 0 : i32
    %c0_i32_1 = arith.constant 0 : i32
    return %c0_i32, %arg0, %c0_i32_0 : i32, i32, i32
  }
  func.func @transform_2(%arg0: i32) -> (i32, i32) {
    %c0_i32 = arith.constant 0 : i32
    %c0_i32_0 = arith.constant 0 : i32
    %c0_i32_1 = arith.constant 0 : i32
    return %c0_i32, %c0_i32_0 : i32, i32
  }
  func.func @transform_3(%arg0: i32) -> (i32, i32) {
    %c0_i32 = arith.constant 0 : i32
    %c0_i32_0 = arith.constant 0 : i32
    %c0_i32_1 = arith.constant 0 : i32
    return %c0_i32, %c0_i32_0 : i32, i32
  }
  func.func @transform_4(%arg0: i32) -> (i32, i32, i32) {
    %c0_i32 = arith.constant 0 : i32
    %c0_i32_0 = arith.constant 0 : i32
    %c0_i32_1 = arith.constant 0 : i32
    %c0_i32_2 = arith.constant 0 : i32
    return %c0_i32, %c0_i32_0, %c0_i32_1 : i32, i32, i32
  }
  func.func @transform_5(%arg0: i32) -> (i32, i32, i32) {
    %c0_i32 = arith.constant 0 : i32
    %c0_i32_0 = arith.constant 0 : i32
    %c0_i32_1 = arith.constant 0 : i32
    %c0_i32_2 = arith.constant 0 : i32
    return %c0_i32, %c0_i32_0, %c0_i32_1 : i32, i32, i32
  }
  func.func @transform_6(%arg0: i32) -> (i32, i32) {
    %c0_i32 = arith.constant 0 : i32
    %c0_i32_0 = arith.constant 0 : i32
    %c0_i32_1 = arith.constant 0 : i32
    return %c0_i32, %c0_i32_0 : i32, i32
  }
  func.func @transform_7(%arg0: i32) -> (i32, i32) {
    %c0_i32 = arith.constant 0 : i32
    %c0_i32_0 = arith.constant 0 : i32
    %c0_i32_1 = arith.constant 0 : i32
    return %c0_i32, %c0_i32_0 : i32, i32
  }
  func.func @transform_8(%arg0: i32) -> (i32, i32) {
    %c0_i32 = arith.constant 0 : i32
    %c0_i32_0 = arith.constant 0 : i32
    %c0_i32_1 = arith.constant 0 : i32
    return %c0_i32, %c0_i32_0 : i32, i32
  }
  func.func @transform_9(%arg0: i32) -> (i32, i32) {
    %c0_i32 = arith.constant 0 : i32
    %c0_i32_0 = arith.constant 0 : i32
    %c0_i32_1 = arith.constant 0 : i32
    return %c0_i32, %c0_i32_0 : i32, i32
  }
  func.func @transform_10(%arg0: i32) -> (i32, i32) {
    %c0_i32 = arith.constant 0 : i32
    %c0_i32_0 = arith.constant 0 : i32
    %c0_i32_1 = arith.constant 0 : i32
    return %c0_i32, %c0_i32_0 : i32, i32
  }
  func.func @transform_11(%arg0: i32) -> (i32, i32) {
    %c0_i32 = arith.constant 0 : i32
    %c0_i32_0 = arith.constant 0 : i32
    %c0_i32_1 = arith.constant 0 : i32
    return %c0_i32, %c0_i32_0 : i32, i32
  }
  func.func @transform_12(%arg0: i32) -> (i32, i32) {
    %c0_i32 = arith.constant 0 : i32
    %c0_i32_0 = arith.constant 0 : i32
    %c0_i32_1 = arith.constant 0 : i32
    return %c0_i32, %c0_i32_0 : i32, i32
  }
  func.func @transform_13(%arg0: i32) -> (i32, i32) {
    %c0_i32 = arith.constant 0 : i32
    %c0_i32_0 = arith.constant 0 : i32
    %c0_i32_1 = arith.constant 0 : i32
    return %c0_i32, %c0_i32_0 : i32, i32
  }
  func.func @transform_14(%arg0: i32) -> (i32, i32) {
    %c0_i32 = arith.constant 0 : i32
    %c0_i32_0 = arith.constant 0 : i32
    return %arg0, %c0_i32 : i32, i32
  }
}

</mosaic_0001>

<llo_original>
// kernel: tpu_custom_call.1
$region0: #{tpu_custom_call.1}
  #allocation0 [shape = 'u32[]', space=smem, size = 0x4, offset = 0x4, fixed_abs, tag = 'smem constant byte address 0x4 - core index']
  #allocation1 [shape = 'u32[72,128]{1,0:T(1,128)}', space=vmem, size = 0x9000, scoped, tag = 'internal scratch']
  #allocation2 [shape = 'f32[8,32,128]{2,1,0:T(8,128)}', space=vmem, size = 0x20000, scoped, tag = 'scratch operand']
  %s0 = inlined_call_operand.hbm [shape: bf16[8,16,16], index: 0, kind: input, shape index: {}]
  %s1 = inlined_call_operand.hbm [shape: bf16[8,16,16], index: 1, kind: input, shape index: {}]
  %s2 = inlined_call_operand.hbm [shape: bf16[16,128], index: 2, kind: input, shape index: {}]
  %s3 = inlined_call_operand.hbm [shape: bf16[128,128], index: 3, kind: input, shape index: {}]
  %s4 = inlined_call_operand.hbm [shape: bf16[1,256,128], index: 4, kind: input, shape index: {}]
  %s5 = inlined_call_operand.vmem [shape: f32[2,1,128], index: 5, kind: input, shape index: {}]
  %s6 = inlined_call_operand.hbm [shape: bf16[128,128], index: 6, kind: input, shape index: {}]
  %s7 = inlined_call_operand.vmem [shape: f32[1,128], index: 7, kind: input, shape index: {}]
  %s8 = inlined_call_operand.hbm [shape: bf16[256,128], index: 8, kind: input, shape index: {}]
  %s9 = inlined_call_operand.vmem [shape: f32[1,128], index: 9, kind: input, shape index: {}]
  %s10 = inlined_call_operand.hbm [shape: bf16[128,128], index: 10, kind: input, shape index: {}]
  %s11 = inlined_call_operand.vmem [shape: f32[1,128], index: 11, kind: input, shape index: {}]
  %s12 = inlined_call_operand.hbm [shape: bf16[128,128], index: 12, kind: input, shape index: {}]
  %s13 = inlined_call_operand.vmem [shape: f32[1,128], index: 13, kind: input, shape index: {}]
  %s14 = inlined_call_operand.hbm [shape: f32[16,128], index: 14, kind: output, shape index: {}]
  %s15 = sld [smem:[#allocation0]]
  $region102: #{tpu_custom_call.1} parent=0
    _
  %s17 = ssub.s32 1, %s15
  %s18 = scalar_select 0, %s17, %s15
  $region1: #{tpu_custom_call.1} parent=0
    #allocation3 [shape = 'u8[32768]{0}', space=vmem, size = 0x8000, scoped, tag = 'input window, operand 0, single buffered']
    #allocation4 [shape = 's32[1]{0}', space=sflag, size = 0x4, scoped, tag = 'scoped memory for tpu_custom_call.1']
    #allocation5 [shape = 's32[1]{0}', space=sflag, size = 0x4, scoped, tag = 'scoped memory for tpu_custom_call.1']
    #allocation6 [shape = 'u8[32768]{0}', space=vmem, size = 0x8000, scoped, tag = 'input window, operand 1, single buffered']
    #allocation7 [shape = 's32[1]{0}', space=sflag, size = 0x4, scoped, tag = 'scoped memory for tpu_custom_call.1']
    #allocation8 [shape = 'u8[4096]{0}', space=vmem, size = 0x1000, scoped, tag = 'input window, operand 2, single buffered']
    #allocation9 [shape = 'u8[32768]{0}', space=vmem, size = 0x8000, scoped, tag = 'input window, operand 3, single buffered']
    #allocation10 [shape = 's32[1]{0}', space=sflag, size = 0x4, scoped, tag = 'scoped memory for tpu_custom_call.1']
    #allocation11 [shape = 'u8[65536]{0}', space=vmem, size = 0x10000, scoped, tag = 'input window, operand 4, single buffered']
    #allocation12 [shape = 'u8[32768]{0}', space=vmem, size = 0x8000, scoped, tag = 'input window, operand 6, single buffered']
    #allocation13 [shape = 's32[1]{0}', space=sflag, size = 0x4, scoped, tag = 'scoped memory for tpu_custom_call.1']
    #allocation14 [shape = 'u8[65536]{0}', space=vmem, size = 0x10000, scoped, tag = 'input window, operand 8, single buffered']
    #allocation15 [shape = 'u8[32768]{0}', space=vmem, size = 0x8000, scoped, tag = 'input window, operand 10, single buffered']
    #allocation16 [shape = 's32[1]{0}', space=sflag, size = 0x4, scoped, tag = 'scoped memory for tpu_custom_call.1']
    #allocation17 [shape = 'u8[32768]{0}', space=vmem, size = 0x8000, scoped, tag = 'input window, operand 12, single buffered']
    #allocation18 [shape = 'u8[8192]{0}', space=vmem, size = 0x2000, scoped, tag = 'output window, operand 0, single buffered']
    %19 = vsyncpa [#allocation4], 0
    %20 = vsyncpa [#allocation7], 0
    %21 = vsyncpa [#allocation10], 0
    %22 = vsyncpa [#allocation13], 0
    %23 = vsyncpa [#allocation16], 0
    %24 = vsyncpa [#allocation5], 0
    // Predicated region
    $region2: #{tpu_custom_call.1} parent=1 // pred_check
      _
    $region3: #{tpu_custom_call.1} parent=1 // pred_check_branch
      %26 = sbr.rel (0) target = $region5
    $region4: #{tpu_custom_call.1} parent=1 // pred_region
      %28 = vsyncadd [#allocation4], 0
      %s29 = sshll.u32 %s0, 4
      %s30 = int_to_ptr.hbm [resolvable:$true] %s29
      %s31 = sshll.u32 [#allocation3], 4
      %s32 = int_to_ptr.vmem [resolvable:$true] %s31
      %37 = dma.hbm_to_vmem [thread:$0]  %s30, 1024, %s32, [#allocation4], 64, 64, 4
    $region5: #{tpu_custom_call.1} parent=1 // pred_fallthru
      _
    // Predicated region
    $region6: #{tpu_custom_call.1} parent=1 // pred_check
      _
    $region7: #{tpu_custom_call.1} parent=1 // pred_check_branch
      %39 = sbr.rel (0) target = $region9
    $region8: #{tpu_custom_call.1} parent=1 // pred_region
      %41 = vsyncadd [#allocation7], 0
      %s42 = sshll.u32 %s1, 4
      %s43 = int_to_ptr.hbm [resolvable:$true] %s42
      %s44 = sshll.u32 [#allocation6], 4
      %s45 = int_to_ptr.vmem [resolvable:$true] %s44
      %50 = dma.hbm_to_vmem [thread:$0]  %s43, 1024, %s45, [#allocation7], 64, 64, 4
    $region9: #{tpu_custom_call.1} parent=1 // pred_fallthru
      _
    // Predicated region
    $region10: #{tpu_custom_call.1} parent=1 // pred_check
      _
    $region11: #{tpu_custom_call.1} parent=1 // pred_check_branch
      %52 = sbr.rel (0) target = $region13
    $region12: #{tpu_custom_call.1} parent=1 // pred_region
      %54 = vsyncadd [#allocation7], 0
      %s55 = sshll.u32 %s2, 4
      %s56 = int_to_ptr.hbm [resolvable:$true] %s55
      %s57 = sshll.u32 [#allocation8], 4
      %s58 = int_to_ptr.vmem [resolvable:$true] %s57
      %63 = dma.hbm_to_vmem [thread:$0]  %s56, 128, %s58, [#allocation7], 64, 64, 4
    $region13: #{tpu_custom_call.1} parent=1 // pred_fallthru
      _
    // Predicated region
    $region14: #{tpu_custom_call.1} parent=1 // pred_check
      _
    $region15: #{tpu_custom_call.1} parent=1 // pred_check_branch
      %65 = sbr.rel (0) target = $region17
    $region16: #{tpu_custom_call.1} parent=1 // pred_region
      %67 = vsyncadd [#allocation10], 0
      %s68 = sshll.u32 %s3, 4
      %s69 = int_to_ptr.hbm [resolvable:$true] %s68
      %s70 = sshll.u32 [#allocation9], 4
      %s71 = int_to_ptr.vmem [resolvable:$true] %s70
      %76 = dma.hbm_to_vmem [thread:$0]  %s69, 1024, %s71, [#allocation10], 64, 64, 4
    $region17: #{tpu_custom_call.1} parent=1 // pred_fallthru
      _
    // Predicated region
    $region18: #{tpu_custom_call.1} parent=1 // pred_check
      _
    $region19: #{tpu_custom_call.1} parent=1 // pred_check_branch
      %78 = sbr.rel (0) target = $region21
    $region20: #{tpu_custom_call.1} parent=1 // pred_region
      %80 = vsyncadd [#allocation10], 0
      %s81 = sshll.u32 %s4, 4
      %s82 = int_to_ptr.hbm [resolvable:$true] %s81
      %s83 = sshll.u32 [#allocation11], 4
      %s84 = int_to_ptr.vmem [resolvable:$true] %s83
      %89 = dma.hbm_to_vmem [thread:$0]  %s82, 2048, %s84, [#allocation10], 64, 64, 4
    $region21: #{tpu_custom_call.1} parent=1 // pred_fallthru
      _
    // Predicated region
    $region22: #{tpu_custom_call.1} parent=1 // pred_check
      _
    $region23: #{tpu_custom_call.1} parent=1 // pred_check_branch
      %91 = sbr.rel (0) target = $region25
    $region24: #{tpu_custom_call.1} parent=1 // pred_region
      _
    $region25: #{tpu_custom_call.1} parent=1 // pred_fallthru
      _
    // Predicated region
    $region26: #{tpu_custom_call.1} parent=1 // pred_check
      _
    $region27: #{tpu_custom_call.1} parent=1 // pred_check_branch
      %93 = sbr.rel (0) target = $region29
    $region28: #{tpu_custom_call.1} parent=1 // pred_region
      %95 = vsyncadd [#allocation13], 0
      %s96 = sshll.u32 %s6, 4
      %s97 = int_to_ptr.hbm [resolvable:$true] %s96
      %s98 = sshll.u32 [#allocation12], 4
      %s99 = int_to_ptr.vmem [resolvable:$true] %s98
      %104 = dma.hbm_to_vmem [thread:$0]  %s97, 1024, %s99, [#allocation13], 64, 64, 4
    $region29: #{tpu_custom_call.1} parent=1 // pred_fallthru
      _
    // Predicated region
    $region30: #{tpu_custom_call.1} parent=1 // pred_check
      _
    $region31: #{tpu_custom_call.1} parent=1 // pred_check_branch
      %106 = sbr.rel (0) target = $region33
    $region32: #{tpu_custom_call.1} parent=1 // pred_region
      _
    $region33: #{tpu_custom_call.1} parent=1 // pred_fallthru
      _
    // Predicated region
    $region34: #{tpu_custom_call.1} parent=1 // pred_check
      _
    $region35: #{tpu_custom_call.1} parent=1 // pred_check_branch
      %108 = sbr.rel (0) target = $region37
    $region36: #{tpu_custom_call.1} parent=1 // pred_region
      %110 = vsyncadd [#allocation13], 0
      %s111 = sshll.u32 %s8, 4
      %s112 = int_to_ptr.hbm [resolvable:$true] %s111
      %s113 = sshll.u32 [#allocation14], 4
      %s114 = int_to_ptr.vmem [resolvable:$true] %s113
      %119 = dma.hbm_to_vmem [thread:$0]  %s112, 2048, %s114, [#allocation13], 64, 64, 4
    $region37: #{tpu_custom_call.1} parent=1 // pred_fallthru
      _
    // Predicated region
    $region38: #{tpu_custom_call.1} parent=1 // pred_check
      _
    $region39: #{tpu_custom_call.1} parent=1 // pred_check_branch
      %121 = sbr.rel (0) target = $region41
    $region40: #{tpu_custom_call.1} parent=1 // pred_region
      _
    $region41: #{tpu_custom_call.1} parent=1 // pred_fallthru
      _
    // Predicated region
    $region42: #{tpu_custom_call.1} parent=1 // pred_check
      _
    $region43: #{tpu_custom_call.1} parent=1 // pred_check_branch
      %123 = sbr.rel (0) target = $region45
    $region44: #{tpu_custom_call.1} parent=1 // pred_region
      %125 = vsyncadd [#allocation16], 0
      %s126 = sshll.u32 %s10, 4
      %s127 = int_to_ptr.hbm [resolvable:$true] %s126
      %s128 = sshll.u32 [#allocation15], 4
      %s129 = int_to_ptr.vmem [resolvable:$true] %s128
      %134 = dma.hbm_to_vmem [thread:$0]  %s127, 1024, %s129, [#allocation16], 64, 64, 4
    $region45: #{tpu_custom_call.1} parent=1 // pred_fallthru
      _
    // Predicated region
    $region46: #{tpu_custom_call.1} parent=1 // pred_check
      _
    $region47: #{tpu_custom_call.1} parent=1 // pred_check_branch
      %136 = sbr.rel (0) target = $region49
    $region48: #{tpu_custom_call.1} parent=1 // pred_region
      _
    $region49: #{tpu_custom_call.1} parent=1 // pred_fallthru
      _
    // Predicated region
    $region50: #{tpu_custom_call.1} parent=1 // pred_check
      _
    $region51: #{tpu_custom_call.1} parent=1 // pred_check_branch
      %138 = sbr.rel (0) target = $region53
    $region52: #{tpu_custom_call.1} parent=1 // pred_region
      %140 = vsyncadd [#allocation16], 0
      %s141 = sshll.u32 %s12, 4
      %s142 = int_to_ptr.hbm [resolvable:$true] %s141
      %s143 = sshll.u32 [#allocation17], 4
      %s144 = int_to_ptr.vmem [resolvable:$true] %s143
      %149 = dma.hbm_to_vmem [thread:$0]  %s142, 1024, %s144, [#allocation16], 64, 64, 4
    $region53: #{tpu_custom_call.1} parent=1 // pred_fallthru
      _
    // Predicated region
    $region54: #{tpu_custom_call.1} parent=1 // pred_check
      _
    $region55: #{tpu_custom_call.1} parent=1 // pred_check_branch
      %151 = sbr.rel (0) target = $region57
    $region56: #{tpu_custom_call.1} parent=1 // pred_region
      _
    $region57: #{tpu_custom_call.1} parent=1 // pred_fallthru
      _
    // Predicated region
    $region58: #{tpu_custom_call.1} parent=1 // pred_check
      _
    $region59: #{tpu_custom_call.1} parent=1 // pred_check_branch
      %153 = sbr.rel (0) target = $region61
    $region60: #{tpu_custom_call.1} parent=1 // pred_region
      %155 = dma.done [#allocation4], 1024
    $region61: #{tpu_custom_call.1} parent=1 // pred_fallthru
      _
    // Predicated region
    $region62: #{tpu_custom_call.1} parent=1 // pred_check
      _
    $region63: #{tpu_custom_call.1} parent=1 // pred_check_branch
      %157 = sbr.rel (0) target = $region65
    $region64: #{tpu_custom_call.1} parent=1 // pred_region
      %159 = dma.done [#allocation7], 1024
    $region65: #{tpu_custom_call.1} parent=1 // pred_fallthru
      _
    // Predicated region
    $region66: #{tpu_custom_call.1} parent=1 // pred_check
      _
    $region67: #{tpu_custom_call.1} parent=1 // pred_check_branch
      %161 = sbr.rel (0) target = $region69
    $region68: #{tpu_custom_call.1} parent=1 // pred_region
      %163 = dma.done [#allocation7], 128
    $region69: #{tpu_custom_call.1} parent=1 // pred_fallthru
      _
    // Predicated region
    $region70: #{tpu_custom_call.1} parent=1 // pred_check
      _
    $region71: #{tpu_custom_call.1} parent=1 // pred_check_branch
      %165 = sbr.rel (0) target = $region73
    $region72: #{tpu_custom_call.1} parent=1 // pred_region
      %167 = dma.done [#allocation10], 1024
    $region73: #{tpu_custom_call.1} parent=1 // pred_fallthru
      _
    // Predicated region
    $region74: #{tpu_custom_call.1} parent=1 // pred_check
      _
    $region75: #{tpu_custom_call.1} parent=1 // pred_check_branch
      %169 = sbr.rel (0) target = $region77
    $region76: #{tpu_custom_call.1} parent=1 // pred_region
      %171 = dma.done [#allocation10], 2048
    $region77: #{tpu_custom_call.1} parent=1 // pred_fallthru
      _
    // Predicated region
    $region78: #{tpu_custom_call.1} parent=1 // pred_check
      _
    $region79: #{tpu_custom_call.1} parent=1 // pred_check_branch
      %173 = sbr.rel (0) target = $region81
    $region80: #{tpu_custom_call.1} parent=1 // pred_region
      %175 = dma.done [#allocation13], 1024
    $region81: #{tpu_custom_call.1} parent=1 // pred_fallthru
      _
    // Predicated region
    $region82: #{tpu_custom_call.1} parent=1 // pred_check
      _
    $region83: #{tpu_custom_call.1} parent=1 // pred_check_branch
      %177 = sbr.rel (0) target = $region85
    $region84: #{tpu_custom_call.1} parent=1 // pred_region
      %179 = dma.done [#allocation13], 2048
    $region85: #{tpu_custom_call.1} parent=1 // pred_fallthru
      _
    // Predicated region
    $region86: #{tpu_custom_call.1} parent=1 // pred_check
      _
    $region87: #{tpu_custom_call.1} parent=1 // pred_check_branch
      %181 = sbr.rel (0) target = $region89
    $region88: #{tpu_custom_call.1} parent=1 // pred_region
      %183 = dma.done [#allocation16], 1024
    $region89: #{tpu_custom_call.1} parent=1 // pred_fallthru
      _
    // Predicated region
    $region90: #{tpu_custom_call.1} parent=1 // pred_check
      _
    $region91: #{tpu_custom_call.1} parent=1 // pred_check_branch
      %185 = sbr.rel (0) target = $region93
    $region92: #{tpu_custom_call.1} parent=1 // pred_region
      %187 = dma.done [#allocation16], 1024
    $region93: #{tpu_custom_call.1} parent=1 // pred_fallthru
      _
    %v189 = vld [vmem:[#allocation8] sm:$0xf]
    %v190 = vld [vmem:[#allocation8 + $0x4] sm:$0xf]
    %v191 = vld [vmem:[%s5] sm:$0x1]
    %v193 = vperm.slane %v191, 0
    %v195 = vld [vmem:[#allocation3] sm:$0xf]
    %v196 = vld [vmem:[#allocation3 + $0x4] sm:$0xf]
    %v199 = vunpack.c.l.b16 %v195
    %v200 = vunpack.c.l.b16 %v196
    %v201 = vpack.c.b16 %v200, %v199
    %v204 = vunpack.c.l.b16 %v189
    %v205 = vunpack.c.l.b16 %v190
    %v206 = vpack.c.b16 %v205, %v204
    %vm208 = vcmask 130048
    %v210 = vsel %vm208, %v201, 0
    %212 = vmatpush.bf16.msra.mxu0 0
    %213 = vmatpush.bf16.msra.mxu0 0
    %214 = vmatpush.bf16.msra.mxu0 0
    %215 = vmatpush.bf16.msra.mxu0 0
    %216 = vmatpush.bf16.msra.mxu0 0
    %217 = vmatpush.bf16.msra.mxu0 0
    %218 = vmatpush.bf16.msra.mxu0 0
    %219 = vmatpush.bf16.msra.mxu0 %v206
    %220 = vmatmul.bf16.gmra.mxu0 %v210
    %v221 = vpop.f32.mrf.mxu0
    %v222 = vadd.f32 0.0, %v221
    %v223 = vpop.f32.mrf.mxu0
    %v224 = vadd.f32 0.0, %v223
    %225 = vdwg.mxu0
    %v226 = vld [vmem:[#allocation6] sm:$0xf]
    %v227 = vld [vmem:[#allocation6 + $0x4] sm:$0xf]
    %v230 = vunpack.c.l.b16 %v226
    %v231 = vunpack.c.l.b16 %v227
    %v232 = vpack.c.b16 %v231, %v230
    %v234 = vsel %vm208, %v232, 0
    %236 = vmatpush.bf16.msra.mxu0 0
    %237 = vmatpush.bf16.msra.mxu0 0
    %238 = vmatpush.bf16.msra.mxu0 0
    %239 = vmatpush.bf16.msra.mxu0 0
    %240 = vmatpush.bf16.msra.mxu0 0
    %241 = vmatpush.bf16.msra.mxu0 0
    %242 = vmatpush.bf16.msra.mxu0 0
    %243 = vmatpush.bf16.msra.mxu0 %v206
    %244 = vmatmul.bf16.gmra.mxu0 %v234
    %v245 = vpop.f32.mrf.mxu0
    %v246 = vadd.f32 0.0, %v245
    %v247 = vpop.f32.mrf.mxu0
    %v248 = vadd.f32 0.0, %v247
    %249 = vdwg.mxu0
    %v250 = vadd.f32 %v222, %v193
    %v251 = vadd.f32 %v224, %v193
    %v252 = vadd.f32 %v246, %v193
    %v253 = vadd.f32 %v248, %v193
    %254 = vst [vmem:[#allocation2] sm:$0xff] %v250
    %255 = vst [vmem:[#allocation2 + $0x8] sm:$0xff] %v251
    %256 = vst [vmem:[#allocation2 + $0x10] sm:$0xff] %v252
    %257 = vst [vmem:[#allocation2 + $0x18] sm:$0xff] %v253
    %s258 = scalar_lea.vmem [#allocation3], 8
    %v259 = vld [vmem:[%s258] sm:$0xf]
    %v260 = vld [vmem:[%s258 + $0x4] sm:$0xf]
    %v263 = vunpack.c.l.b16 %v259
    %v264 = vunpack.c.l.b16 %v260
    %v265 = vpack.c.b16 %v264, %v263
    %v267 = vsel %vm208, %v265, 0
    %269 = vmatpush.bf16.msra.mxu0 0
    %270 = vmatpush.bf16.msra.mxu0 0
    %271 = vmatpush.bf16.msra.mxu0 0
    %272 = vmatpush.bf16.msra.mxu0 0
    %273 = vmatpush.bf16.msra.mxu0 0
    %274 = vmatpush.bf16.msra.mxu0 0
    %275 = vmatpush.bf16.msra.mxu0 0
    %276 = vmatpush.bf16.msra.mxu0 %v206
    %277 = vmatmul.bf16.gmra.mxu0 %v267
    %v278 = vpop.f32.mrf.mxu0
    %v279 = vadd.f32 0.0, %v278
    %v280 = vpop.f32.mrf.mxu0
    %v281 = vadd.f32 0.0, %v280
    %282 = vdwg.mxu0
    %s283 = scalar_lea.vmem [#allocation6], 8
    %v284 = vld [vmem:[%s283] sm:$0xf]
    %v285 = vld [vmem:[%s283 + $0x4] sm:$0xf]
    %v288 = vunpack.c.l.b16 %v284
    %v289 = vunpack.c.l.b16 %v285
    %v290 = vpack.c.b16 %v289, %v288
    %v292 = vsel %vm208, %v290, 0
    %294 = vmatpush.bf16.msra.mxu0 0
    %295 = vmatpush.bf16.msra.mxu0 0
    %296 = vmatpush.bf16.msra.mxu0 0
    %297 = vmatpush.bf16.msra.mxu0 0
    %298 = vmatpush.bf16.msra.mxu0 0
    %299 = vmatpush.bf16.msra.mxu0 0
    %300 = vmatpush.bf16.msra.mxu0 0
    %301 = vmatpush.bf16.msra.mxu0 %v206
    %302 = vmatmul.bf16.gmra.mxu0 %v292
    %v303 = vpop.f32.mrf.mxu0
    %v304 = vadd.f32 0.0, %v303
    %v305 = vpop.f32.mrf.mxu0
    %v306 = vadd.f32 0.0, %v305
    %307 = vdwg.mxu0
    %v308 = vadd.f32 %v279, %v193
    %v309 = vadd.f32 %v281, %v193
    %v310 = vadd.f32 %v304, %v193
    %v311 = vadd.f32 %v306, %v193
    %s312 = scalar_lea.vmem [#allocation2], 32
    %313 = vst [vmem:[%s312] sm:$0xff] %v308
    %314 = vst [vmem:[%s312 + $0x8] sm:$0xff] %v309
    %315 = vst [vmem:[%s312 + $0x10] sm:$0xff] %v310
    %316 = vst [vmem:[%s312 + $0x18] sm:$0xff] %v311
    %s317 = scalar_lea.vmem [#allocation3], 16
    %v318 = vld [vmem:[%s317] sm:$0xf]
    %v319 = vld [vmem:[%s317 + $0x4] sm:$0xf]
    %v322 = vunpack.c.l.b16 %v318
    %v323 = vunpack.c.l.b16 %v319
    %v324 = vpack.c.b16 %v323, %v322
    %v326 = vsel %vm208, %v324, 0
    %328 = vmatpush.bf16.msra.mxu0 0
    %329 = vmatpush.bf16.msra.mxu0 0
    %330 = vmatpush.bf16.msra.mxu0 0
    %331 = vmatpush.bf16.msra.mxu0 0
    %332 = vmatpush.bf16.msra.mxu0 0
    %333 = vmatpush.bf16.msra.mxu0 0
    %334 = vmatpush.bf16.msra.mxu0 0
    %335 = vmatpush.bf16.msra.mxu0 %v206
    %336 = vmatmul.bf16.gmra.mxu0 %v326
    %v337 = vpop.f32.mrf.mxu0
    %v338 = vadd.f32 0.0, %v337
    %v339 = vpop.f32.mrf.mxu0
    %v340 = vadd.f32 0.0, %v339
    %341 = vdwg.mxu0
    %s342 = scalar_lea.vmem [#allocation6], 16
    %v343 = vld [vmem:[%s342] sm:$0xf]
    %v344 = vld [vmem:[%s342 + $0x4] sm:$0xf]
    %v347 = vunpack.c.l.b16 %v343
    %v348 = vunpack.c.l.b16 %v344
    %v349 = vpack.c.b16 %v348, %v347
    %v351 = vsel %vm208, %v349, 0
    %353 = vmatpush.bf16.msra.mxu0 0
    %354 = vmatpush.bf16.msra.mxu0 0
    %355 = vmatpush.bf16.msra.mxu0 0
    %356 = vmatpush.bf16.msra.mxu0 0
    %357 = vmatpush.bf16.msra.mxu0 0
    %358 = vmatpush.bf16.msra.mxu0 0
    %359 = vmatpush.bf16.msra.mxu0 0
    %360 = vmatpush.bf16.msra.mxu0 %v206
    %361 = vmatmul.bf16.gmra.mxu0 %v351
    %v362 = vpop.f32.mrf.mxu0
    %v363 = vadd.f32 0.0, %v362
    %v364 = vpop.f32.mrf.mxu0
    %v365 = vadd.f32 0.0, %v364
    %366 = vdwg.mxu0
    %v367 = vadd.f32 %v338, %v193
    %v368 = vadd.f32 %v340, %v193
    %v369 = vadd.f32 %v363, %v193
    %v370 = vadd.f32 %v365, %v193
    %s371 = scalar_lea.vmem [#allocation2], 64
    %372 = vst [vmem:[%s371] sm:$0xff] %v367
    %373 = vst [vmem:[%s371 + $0x8] sm:$0xff] %v368
    %374 = vst [vmem:[%s371 + $0x10] sm:$0xff] %v369
    %375 = vst [vmem:[%s371 + $0x18] sm:$0xff] %v370
    %s376 = scalar_lea.vmem [#allocation3], 24
    %v377 = vld [vmem:[%s376] sm:$0xf]
    %v378 = vld [vmem:[%s376 + $0x4] sm:$0xf]
    %v381 = vunpack.c.l.b16 %v377
    %v382 = vunpack.c.l.b16 %v378
    %v383 = vpack.c.b16 %v382, %v381
    %v385 = vsel %vm208, %v383, 0
    %387 = vmatpush.bf16.msra.mxu0 0
    %388 = vmatpush.bf16.msra.mxu0 0
    %389 = vmatpush.bf16.msra.mxu0 0
    %390 = vmatpush.bf16.msra.mxu0 0
    %391 = vmatpush.bf16.msra.mxu0 0
    %392 = vmatpush.bf16.msra.mxu0 0
    %393 = vmatpush.bf16.msra.mxu0 0
    %394 = vmatpush.bf16.msra.mxu0 %v206
    %395 = vmatmul.bf16.gmra.mxu0 %v385
    %v396 = vpop.f32.mrf.mxu0
    %v397 = vadd.f32 0.0, %v396
    %v398 = vpop.f32.mrf.mxu0
    %v399 = vadd.f32 0.0, %v398
    %400 = vdwg.mxu0
    %s401 = scalar_lea.vmem [#allocation6], 24
    %v402 = vld [vmem:[%s401] sm:$0xf]
    %v403 = vld [vmem:[%s401 + $0x4] sm:$0xf]
    %v406 = vunpack.c.l.b16 %v402
    %v407 = vunpack.c.l.b16 %v403
    %v408 = vpack.c.b16 %v407, %v406
    %v410 = vsel %vm208, %v408, 0
    %412 = vmatpush.bf16.msra.mxu0 0
    %413 = vmatpush.bf16.msra.mxu0 0
    %414 = vmatpush.bf16.msra.mxu0 0
    %415 = vmatpush.bf16.msra.mxu0 0
    %416 = vmatpush.bf16.msra.mxu0 0
    %417 = vmatpush.bf16.msra.mxu0 0
    %418 = vmatpush.bf16.msra.mxu0 0
    %419 = vmatpush.bf16.msra.mxu0 %v206
    %420 = vmatmul.bf16.gmra.mxu0 %v410
    %v421 = vpop.f32.mrf.mxu0
    %v422 = vadd.f32 0.0, %v421
    %v423 = vpop.f32.mrf.mxu0
    %v424 = vadd.f32 0.0, %v423
    %425 = vdwg.mxu0
    %v426 = vadd.f32 %v397, %v193
    %v427 = vadd.f32 %v399, %v193
    %v428 = vadd.f32 %v422, %v193
    %v429 = vadd.f32 %v424, %v193
    %s430 = scalar_lea.vmem [#allocation2], 96
    %431 = vst [vmem:[%s430] sm:$0xff] %v426
    %432 = vst [vmem:[%s430 + $0x8] sm:$0xff] %v427
    %433 = vst [vmem:[%s430 + $0x10] sm:$0xff] %v428
    %434 = vst [vmem:[%s430 + $0x18] sm:$0xff] %v429
    %s435 = scalar_lea.vmem [#allocation3], 32
    %v436 = vld [vmem:[%s435] sm:$0xf]
    %v437 = vld [vmem:[%s435 + $0x4] sm:$0xf]
    %v440 = vunpack.c.l.b16 %v436
    %v441 = vunpack.c.l.b16 %v437
    %v442 = vpack.c.b16 %v441, %v440
    %v444 = vsel %vm208, %v442, 0
    %446 = vmatpush.bf16.msra.mxu0 0
    %447 = vmatpush.bf16.msra.mxu0 0
    %448 = vmatpush.bf16.msra.mxu0 0
    %449 = vmatpush.bf16.msra.mxu0 0
    %450 = vmatpush.bf16.msra.mxu0 0
    %451 = vmatpush.bf16.msra.mxu0 0
    %452 = vmatpush.bf16.msra.mxu0 0
    %453 = vmatpush.bf16.msra.mxu0 %v206
    %454 = vmatmul.bf16.gmra.mxu0 %v444
    %v455 = vpop.f32.mrf.mxu0
    %v456 = vadd.f32 0.0, %v455
    %v457 = vpop.f32.mrf.mxu0
    %v458 = vadd.f32 0.0, %v457
    %459 = vdwg.mxu0
    %s460 = scalar_lea.vmem [#allocation6], 32
    %v461 = vld [vmem:[%s460] sm:$0xf]
    %v462 = vld [vmem:[%s460 + $0x4] sm:$0xf]
    %v465 = vunpack.c.l.b16 %v461
    %v466 = vunpack.c.l.b16 %v462
    %v467 = vpack.c.b16 %v466, %v465
    %v469 = vsel %vm208, %v467, 0
    %471 = vmatpush.bf16.msra.mxu0 0
    %472 = vmatpush.bf16.msra.mxu0 0
    %473 = vmatpush.bf16.msra.mxu0 0
    %474 = vmatpush.bf16.msra.mxu0 0
    %475 = vmatpush.bf16.msra.mxu0 0
    %476 = vmatpush.bf16.msra.mxu0 0
    %477 = vmatpush.bf16.msra.mxu0 0
    %478 = vmatpush.bf16.msra.mxu0 %v206
    %479 = vmatmul.bf16.gmra.mxu0 %v469
    %v480 = vpop.f32.mrf.mxu0
    %v481 = vadd.f32 0.0, %v480
    %v482 = vpop.f32.mrf.mxu0
    %v483 = vadd.f32 0.0, %v482
    %484 = vdwg.mxu0
    %v485 = vadd.f32 %v456, %v193
    %v486 = vadd.f32 %v458, %v193
    %v487 = vadd.f32 %v481, %v193
    %v488 = vadd.f32 %v483, %v193
    %s489 = scalar_lea.vmem [#allocation2], 128
    %490 = vst [vmem:[%s489] sm:$0xff] %v485
    %491 = vst [vmem:[%s489 + $0x8] sm:$0xff] %v486
    %492 = vst [vmem:[%s489 + $0x10] sm:$0xff] %v487
    %493 = vst [vmem:[%s489 + $0x18] sm:$0xff] %v488
    %s494 = scalar_lea.vmem [#allocation3], 40
    %v495 = vld [vmem:[%s494] sm:$0xf]
    %v496 = vld [vmem:[%s494 + $0x4] sm:$0xf]
    %v499 = vunpack.c.l.b16 %v495
    %v500 = vunpack.c.l.b16 %v496
    %v501 = vpack.c.b16 %v500, %v499
    %v503 = vsel %vm208, %v501, 0
    %505 = vmatpush.bf16.msra.mxu0 0
    %506 = vmatpush.bf16.msra.mxu0 0
    %507 = vmatpush.bf16.msra.mxu0 0
    %508 = vmatpush.bf16.msra.mxu0 0
    %509 = vmatpush.bf16.msra.mxu0 0
    %510 = vmatpush.bf16.msra.mxu0 0
    %511 = vmatpush.bf16.msra.mxu0 0
    %512 = vmatpush.bf16.msra.mxu0 %v206
    %513 = vmatmul.bf16.gmra.mxu0 %v503
    %v514 = vpop.f32.mrf.mxu0
    %v515 = vadd.f32 0.0, %v514
    %v516 = vpop.f32.mrf.mxu0
    %v517 = vadd.f32 0.0, %v516
    %518 = vdwg.mxu0
    %s519 = scalar_lea.vmem [#allocation6], 40
    %v520 = vld [vmem:[%s519] sm:$0xf]
    %v521 = vld [vmem:[%s519 + $0x4] sm:$0xf]
    %v524 = vunpack.c.l.b16 %v520
    %v525 = vunpack.c.l.b16 %v521
    %v526 = vpack.c.b16 %v525, %v524
    %v528 = vsel %vm208, %v526, 0
    %530 = vmatpush.bf16.msra.mxu0 0
    %531 = vmatpush.bf16.msra.mxu0 0
    %532 = vmatpush.bf16.msra.mxu0 0
    %533 = vmatpush.bf16.msra.mxu0 0
    %534 = vmatpush.bf16.msra.mxu0 0
    %535 = vmatpush.bf16.msra.mxu0 0
    %536 = vmatpush.bf16.msra.mxu0 0
    %537 = vmatpush.bf16.msra.mxu0 %v206
    %538 = vmatmul.bf16.gmra.mxu0 %v528
    %v539 = vpop.f32.mrf.mxu0
    %v540 = vadd.f32 0.0, %v539
    %v541 = vpop.f32.mrf.mxu0
    %v542 = vadd.f32 0.0, %v541
    %543 = vdwg.mxu0
    %v544 = vadd.f32 %v515, %v193
    %v545 = vadd.f32 %v517, %v193
    %v546 = vadd.f32 %v540, %v193
    %v547 = vadd.f32 %v542, %v193
    %s548 = scalar_lea.vmem [#allocation2], 160
    %549 = vst [vmem:[%s548] sm:$0xff] %v544
    %550 = vst [vmem:[%s548 + $0x8] sm:$0xff] %v545
    %551 = vst [vmem:[%s548 + $0x10] sm:$0xff] %v546
    %552 = vst [vmem:[%s548 + $0x18] sm:$0xff] %v547
    %s553 = scalar_lea.vmem [#allocation3], 48
    %v554 = vld [vmem:[%s553] sm:$0xf]
    %v555 = vld [vmem:[%s553 + $0x4] sm:$0xf]
    %v558 = vunpack.c.l.b16 %v554
    %v559 = vunpack.c.l.b16 %v555
    %v560 = vpack.c.b16 %v559, %v558
    %v562 = vsel %vm208, %v560, 0
    %564 = vmatpush.bf16.msra.mxu0 0
    %565 = vmatpush.bf16.msra.mxu0 0
    %566 = vmatpush.bf16.msra.mxu0 0
    %567 = vmatpush.bf16.msra.mxu0 0
    %568 = vmatpush.bf16.msra.mxu0 0
    %569 = vmatpush.bf16.msra.mxu0 0
    %570 = vmatpush.bf16.msra.mxu0 0
    %571 = vmatpush.bf16.msra.mxu0 %v206
    %572 = vmatmul.bf16.gmra.mxu0 %v562
    %v573 = vpop.f32.mrf.mxu0
    %v574 = vadd.f32 0.0, %v573
    %v575 = vpop.f32.mrf.mxu0
    %v576 = vadd.f32 0.0, %v575
    %577 = vdwg.mxu0
    %s578 = scalar_lea.vmem [#allocation6], 48
    %v579 = vld [vmem:[%s578] sm:$0xf]
    %v580 = vld [vmem:[%s578 + $0x4] sm:$0xf]
    %v583 = vunpack.c.l.b16 %v579
    %v584 = vunpack.c.l.b16 %v580
    %v585 = vpack.c.b16 %v584, %v583
    %v587 = vsel %vm208, %v585, 0
    %589 = vmatpush.bf16.msra.mxu0 0
    %590 = vmatpush.bf16.msra.mxu0 0
    %591 = vmatpush.bf16.msra.mxu0 0
    %592 = vmatpush.bf16.msra.mxu0 0
    %593 = vmatpush.bf16.msra.mxu0 0
    %594 = vmatpush.bf16.msra.mxu0 0
    %595 = vmatpush.bf16.msra.mxu0 0
    %596 = vmatpush.bf16.msra.mxu0 %v206
    %597 = vmatmul.bf16.gmra.mxu0 %v587
    %v598 = vpop.f32.mrf.mxu0
    %v599 = vadd.f32 0.0, %v598
    %v600 = vpop.f32.mrf.mxu0
    %v601 = vadd.f32 0.0, %v600
    %602 = vdwg.mxu0
    %v603 = vadd.f32 %v574, %v193
    %v604 = vadd.f32 %v576, %v193
    %v605 = vadd.f32 %v599, %v193
    %v606 = vadd.f32 %v601, %v193
    %s607 = scalar_lea.vmem [#allocation2], 192
    %608 = vst [vmem:[%s607] sm:$0xff] %v603
    %609 = vst [vmem:[%s607 + $0x8] sm:$0xff] %v604
    %610 = vst [vmem:[%s607 + $0x10] sm:$0xff] %v605
    %611 = vst [vmem:[%s607 + $0x18] sm:$0xff] %v606
    %s612 = scalar_lea.vmem [#allocation3], 56
    %v613 = vld [vmem:[%s612] sm:$0xf]
    %v614 = vld [vmem:[%s612 + $0x4] sm:$0xf]
    %v617 = vunpack.c.l.b16 %v613
    %v618 = vunpack.c.l.b16 %v614
    %v619 = vpack.c.b16 %v618, %v617
    %v621 = vsel %vm208, %v619, 0
    %623 = vmatpush.bf16.msra.mxu0 0
    %624 = vmatpush.bf16.msra.mxu0 0
    %625 = vmatpush.bf16.msra.mxu0 0
    %626 = vmatpush.bf16.msra.mxu0 0
    %627 = vmatpush.bf16.msra.mxu0 0
    %628 = vmatpush.bf16.msra.mxu0 0
    %629 = vmatpush.bf16.msra.mxu0 0
    %630 = vmatpush.bf16.msra.mxu0 %v206
    %631 = vmatmul.bf16.gmra.mxu0 %v621
    %v632 = vpop.f32.mrf.mxu0
    %v633 = vadd.f32 0.0, %v632
    %v634 = vpop.f32.mrf.mxu0
    %v635 = vadd.f32 0.0, %v634
    %636 = vdwg.mxu0
    %s637 = scalar_lea.vmem [#allocation6], 56
    %v638 = vld [vmem:[%s637] sm:$0xf]
    %v639 = vld [vmem:[%s637 + $0x4] sm:$0xf]
    %v642 = vunpack.c.l.b16 %v638
    %v643 = vunpack.c.l.b16 %v639
    %v644 = vpack.c.b16 %v643, %v642
    %v646 = vsel %vm208, %v644, 0
    %648 = vmatpush.bf16.msra.mxu0 0
    %649 = vmatpush.bf16.msra.mxu0 0
    %650 = vmatpush.bf16.msra.mxu0 0
    %651 = vmatpush.bf16.msra.mxu0 0
    %652 = vmatpush.bf16.msra.mxu0 0
    %653 = vmatpush.bf16.msra.mxu0 0
    %654 = vmatpush.bf16.msra.mxu0 0
    %655 = vmatpush.bf16.msra.mxu0 %v206
    %656 = vmatmul.bf16.gmra.mxu0 %v646
    %v657 = vpop.f32.mrf.mxu0
    %v658 = vadd.f32 0.0, %v657
    %v659 = vpop.f32.mrf.mxu0
    %v660 = vadd.f32 0.0, %v659
    %661 = vdwg.mxu0
    %v662 = vadd.f32 %v633, %v193
    %v663 = vadd.f32 %v635, %v193
    %v664 = vadd.f32 %v658, %v193
    %v665 = vadd.f32 %v660, %v193
    %s666 = scalar_lea.vmem [#allocation2], 224
    %667 = vst [vmem:[%s666] sm:$0xff] %v662
    %668 = vst [vmem:[%s666 + $0x8] sm:$0xff] %v663
    %669 = vst [vmem:[%s666 + $0x10] sm:$0xff] %v664
    %670 = vst [vmem:[%s666 + $0x18] sm:$0xff] %v665
    %v671 = vld [vmem:[#allocation9] sm:$0xf]
    %v672 = vld [vmem:[#allocation9 + $0x4] sm:$0xf]
    %v673 = vld [vmem:[#allocation9 + $0x8] sm:$0xf]
    %v674 = vld [vmem:[#allocation9 + $0xc] sm:$0xf]
    %v675 = vld [vmem:[#allocation9 + $0x10] sm:$0xf]
    %v676 = vld [vmem:[#allocation9 + $0x14] sm:$0xf]
    %v677 = vld [vmem:[#allocation9 + $0x18] sm:$0xf]
    %v678 = vld [vmem:[#allocation9 + $0x1c] sm:$0xf]
    %v679 = vld [vmem:[#allocation9 + $0x20] sm:$0xf]
    %v680 = vld [vmem:[#allocation9 + $0x24] sm:$0xf]
    %v681 = vld [vmem:[#allocation9 + $0x28] sm:$0xf]
    %v682 = vld [vmem:[#allocation9 + $0x2c] sm:$0xf]
    %v683 = vld [vmem:[#allocation9 + $0x30] sm:$0xf]
    %v684 = vld [vmem:[#allocation9 + $0x34] sm:$0xf]
    %v685 = vld [vmem:[#allocation9 + $0x38] sm:$0xf]
    %v686 = vld [vmem:[#allocation9 + $0x3c] sm:$0xf]
    %v687 = vld [vmem:[#allocation11] sm:$0xf]
    %v688 = vld [vmem:[#allocation11 + $0x4] sm:$0xf]
    %v689 = vld [vmem:[#allocation11 + $0x8] sm:$0xf]
    %v690 = vld [vmem:[#allocation11 + $0xc] sm:$0xf]
    %v691 = vld [vmem:[#allocation11 + $0x10] sm:$0xf]
    %v692 = vld [vmem:[#allocation11 + $0x14] sm:$0xf]
    %v693 = vld [vmem:[#allocation11 + $0x18] sm:$0xf]
    %v694 = vld [vmem:[#allocation11 + $0x1c] sm:$0xf]
    %v695 = vld [vmem:[#allocation11 + $0x20] sm:$0xf]
    %v696 = vld [vmem:[#allocation11 + $0x24] sm:$0xf]
    %v697 = vld [vmem:[#allocation11 + $0x28] sm:$0xf]
    %v698 = vld [vmem:[#allocation11 + $0x2c] sm:$0xf]
    %v699 = vld [vmem:[#allocation11 + $0x30] sm:$0xf]
    %v700 = vld [vmem:[#allocation11 + $0x34] sm:$0xf]
    %v701 = vld [vmem:[#allocation11 + $0x38] sm:$0xf]
    %v702 = vld [vmem:[#allocation11 + $0x3c] sm:$0xf]
    %v703 = vld [vmem:[#allocation11 + $0x40] sm:$0xf]
    %v704 = vld [vmem:[#allocation11 + $0x44] sm:$0xf]
    %v705 = vld [vmem:[#allocation11 + $0x48] sm:$0xf]
    %v706 = vld [vmem:[#allocation11 + $0x4c] sm:$0xf]
    %v707 = vld [vmem:[#allocation11 + $0x50] sm:$0xf]
    %v708 = vld [vmem:[#allocation11 + $0x54] sm:$0xf]
    %v709 = vld [vmem:[#allocation11 + $0x58] sm:$0xf]
    %v710 = vld [vmem:[#allocation11 + $0x5c] sm:$0xf]
    %v711 = vld [vmem:[#allocation11 + $0x60] sm:$0xf]
    %v712 = vld [vmem:[#allocation11 + $0x64] sm:$0xf]
    %v713 = vld [vmem:[#allocation11 + $0x68] sm:$0xf]
    %v714 = vld [vmem:[#allocation11 + $0x6c] sm:$0xf]
    %v715 = vld [vmem:[#allocation11 + $0x70] sm:$0xf]
    %v716 = vld [vmem:[#allocation11 + $0x74] sm:$0xf]
    %v717 = vld [vmem:[#allocation11 + $0x78] sm:$0xf]
    %v718 = vld [vmem:[#allocation11 + $0x7c] sm:$0xf]
    %s719 = scalar_lea.vmem %s5, 1
    %v720 = vld [vmem:[%s719] sm:$0x1]
    %v722 = vperm.slane %v720, 0
    %v724 = vld [vmem:[#allocation2] sm:$0xff]
    %v725 = vld [vmem:[#allocation2 + $0x8] sm:$0xff]
    %v726 = vld [vmem:[#allocation2 + $0x10] sm:$0xff]
    %v727 = vld [vmem:[#allocation2 + $0x18] sm:$0xff]
    %v744 = vunpack.c.l.b16 %v671
    %v745 = vunpack.c.l.b16 %v672
    %v746 = vunpack.c.l.b16 %v673
    %v747 = vunpack.c.l.b16 %v674
    %v748 = vunpack.c.l.b16 %v675
    %v749 = vunpack.c.l.b16 %v676
    %v750 = vunpack.c.l.b16 %v677
    %v751 = vunpack.c.l.b16 %v678
    %v752 = vunpack.c.l.b16 %v679
    %v753 = vunpack.c.l.b16 %v680
    %v754 = vunpack.c.l.b16 %v681
    %v755 = vunpack.c.l.b16 %v682
    %v756 = vunpack.c.l.b16 %v683
    %v757 = vunpack.c.l.b16 %v684
    %v758 = vunpack.c.l.b16 %v685
    %v759 = vunpack.c.l.b16 %v686
    %v760 = vpack.c.b16 %v745, %v744
    %v761 = vpack.c.b16 %v747, %v746
    %v762 = vpack.c.b16 %v749, %v748
    %v763 = vpack.c.b16 %v751, %v750
    %v764 = vpack.c.b16 %v753, %v752
    %v765 = vpack.c.b16 %v755, %v754
    %v766 = vpack.c.b16 %v757, %v756
    %v767 = vpack.c.b16 %v759, %v758
    %776 = vmatpush.bf16.msra.mxu0 %v767
    %777 = vmatpush.bf16.msra.mxu0 %v766
    %778 = vmatpush.bf16.msra.mxu0 %v765
    %779 = vmatpush.bf16.msra.mxu0 %v764
    %780 = vmatpush.bf16.msra.mxu0 %v763
    %781 = vmatpush.bf16.msra.mxu0 %v762
    %782 = vmatpush.bf16.msra.mxu0 %v761
    %783 = vmatpush.bf16.msra.mxu0 %v760
    %784 = vmatmul.bf16.gmra.mxu0 0
    %v785 = vpop.f32.mrf.mxu0
    %v786 = vadd.f32 %v724, %v785
    %v787 = vpop.f32.mrf.mxu0
    %v788 = vadd.f32 %v725, %v787
    %789 = vmatmul.bf16.gmra.mxu0 0
    %v790 = vpop.f32.mrf.mxu0
    %v791 = vadd.f32 %v726, %v790
    %v792 = vpop.f32.mrf.mxu0
    %v793 = vadd.f32 %v727, %v792
    %794 = vdwg.mxu0
    %v795 = vtanh.pop %v786
    %v796 = vtanh.pop %v788
    %v797 = vtanh.pop %v791
    %v798 = vtanh.pop %v793
    %v799 = vpack.c.bf16 %v795, %v795
    %v800 = vpack.c.bf16 %v796, %v796
    %v801 = vpack.c.bf16 %v797, %v797
    %v802 = vpack.c.bf16 %v798, %v798
    %v807 = vunpack.c.l.b16 %v799
    %v808 = vunpack.c.l.b16 %v800
    %v809 = vunpack.c.l.b16 %v801
    %v810 = vunpack.c.l.b16 %v802
    %v811 = vpack.c.b16 %v808, %v807
    %v812 = vpack.c.b16 %v810, %v809
    %v847 = vunpack.c.l.b16 %v687
    %v848 = vunpack.c.l.b16 %v688
    %v849 = vunpack.c.l.b16 %v689
    %v850 = vunpack.c.l.b16 %v690
    %v851 = vunpack.c.l.b16 %v691
    %v852 = vunpack.c.l.b16 %v692
    %v853 = vunpack.c.l.b16 %v693
    %v854 = vunpack.c.l.b16 %v694
    %v855 = vunpack.c.l.b16 %v695
    %v856 = vunpack.c.l.b16 %v696
    %v857 = vunpack.c.l.b16 %v697
    %v858 = vunpack.c.l.b16 %v698
    %v859 = vunpack.c.l.b16 %v699
    %v860 = vunpack.c.l.b16 %v700
    %v861 = vunpack.c.l.b16 %v701
    %v862 = vunpack.c.l.b16 %v702
    %v863 = vunpack.c.l.b16 %v703
    %v864 = vunpack.c.l.b16 %v704
    %v865 = vunpack.c.l.b16 %v705
    %v866 = vunpack.c.l.b16 %v706
    %v867 = vunpack.c.l.b16 %v707
    %v868 = vunpack.c.l.b16 %v708
    %v869 = vunpack.c.l.b16 %v709
    %v870 = vunpack.c.l.b16 %v710
    %v871 = vunpack.c.l.b16 %v711
    %v872 = vunpack.c.l.b16 %v712
    %v873 = vunpack.c.l.b16 %v713
    %v874 = vunpack.c.l.b16 %v714
    %v875 = vunpack.c.l.b16 %v715
    %v876 = vunpack.c.l.b16 %v716
    %v877 = vunpack.c.l.b16 %v717
    %v878 = vunpack.c.l.b16 %v718
    %v879 = vpack.c.b16 %v848, %v847
    %v880 = vpack.c.b16 %v850, %v849
    %v881 = vpack.c.b16 %v852, %v851
    %v882 = vpack.c.b16 %v854, %v853
    %v883 = vpack.c.b16 %v856, %v855
    %v884 = vpack.c.b16 %v858, %v857
    %v885 = vpack.c.b16 %v860, %v859
    %v886 = vpack.c.b16 %v862, %v861
    %v887 = vpack.c.b16 %v864, %v863
    %v888 = vpack.c.b16 %v866, %v865
    %v889 = vpack.c.b16 %v868, %v867
    %v890 = vpack.c.b16 %v870, %v869
    %v891 = vpack.c.b16 %v872, %v871
    %v892 = vpack.c.b16 %v874, %v873
    %v893 = vpack.c.b16 %v876, %v875
    %v894 = vpack.c.b16 %v878, %v877
    %911 = vmatpush.bf16.msra.mxu0 %v886
    %912 = vmatpush.bf16.msra.mxu0 %v885
    %913 = vmatpush.bf16.msra.mxu0 %v884
    %914 = vmatpush.bf16.msra.mxu0 %v883
    %915 = vmatpush.bf16.msra.mxu0 %v882
    %916 = vmatpush.bf16.msra.mxu0 %v881
    %917 = vmatpush.bf16.msra.mxu0 %v880
    %918 = vmatpush.bf16.msra.mxu0 %v879
    %919 = vmatmul.bf16.gmra.mxu0 %v811
    %v920 = vpop.f32.mrf.mxu0
    %v921 = vadd.f32 %v722, %v920
    %v922 = vpop.f32.mrf.mxu0
    %v923 = vadd.f32 %v722, %v922
    %924 = vmatmul.bf16.gmra.mxu0 %v812
    %v925 = vpop.f32.mrf.mxu0
    %v926 = vadd.f32 %v722, %v925
    %v927 = vpop.f32.mrf.mxu0
    %v928 = vadd.f32 %v722, %v927
    %929 = vdwg.mxu0
    %930 = vmatpush.bf16.msra.mxu0 %v894
    %931 = vmatpush.bf16.msra.mxu0 %v893
    %932 = vmatpush.bf16.msra.mxu0 %v892
    %933 = vmatpush.bf16.msra.mxu0 %v891
    %934 = vmatpush.bf16.msra.mxu0 %v890
    %935 = vmatpush.bf16.msra.mxu0 %v889
    %936 = vmatpush.bf16.msra.mxu0 %v888
    %937 = vmatpush.bf16.msra.mxu0 %v887
    %938 = vmatmul.bf16.gmra.mxu0 0
    %v939 = vpop.f32.mrf.mxu0
    %v940 = vadd.f32 %v921, %v939
    %v941 = vpop.f32.mrf.mxu0
    %v942 = vadd.f32 %v923, %v941
    %943 = vmatmul.bf16.gmra.mxu0 0
    %v944 = vpop.f32.mrf.mxu0
    %v945 = vadd.f32 %v926, %v944
    %v946 = vpop.f32.mrf.mxu0
    %v947 = vadd.f32 %v928, %v946
    %948 = vdwg.mxu0
    %v949 = vtanh.pop %v940
    %v950 = vtanh.pop %v942
    %v951 = vtanh.pop %v945
    %v952 = vtanh.pop %v947
    %v953 = vpack.c.bf16 %v949, %v949
    %v954 = vpack.c.bf16 %v950, %v950
    %v955 = vpack.c.bf16 %v951, %v951
    %v956 = vpack.c.bf16 %v952, %v952
    %v957 = vld [vmem:[%s312] sm:$0xff]
    %v958 = vld [vmem:[%s312 + $0x8] sm:$0xff]
    %v959 = vld [vmem:[%s312 + $0x10] sm:$0xff]
    %v960 = vld [vmem:[%s312 + $0x18] sm:$0xff]
    %961 = vmatpush.bf16.msra.mxu0 %v767
    %962 = vmatpush.bf16.msra.mxu0 %v766
    %963 = vmatpush.bf16.msra.mxu0 %v765
    %964 = vmatpush.bf16.msra.mxu0 %v764
    %965 = vmatpush.bf16.msra.mxu0 %v763
    %966 = vmatpush.bf16.msra.mxu0 %v762
    %967 = vmatpush.bf16.msra.mxu0 %v761
    %968 = vmatpush.bf16.msra.mxu0 %v760
    %969 = vmatmul.bf16.gmra.mxu0 %v811
    %v970 = vpop.f32.mrf.mxu0
    %v971 = vadd.f32 %v957, %v970
    %v972 = vpop.f32.mrf.mxu0
    %v973 = vadd.f32 %v958, %v972
    %974 = vmatmul.bf16.gmra.mxu0 %v812
    %v975 = vpop.f32.mrf.mxu0
    %v976 = vadd.f32 %v959, %v975
    %v977 = vpop.f32.mrf.mxu0
    %v978 = vadd.f32 %v960, %v977
    %979 = vdwg.mxu0
    %v980 = vtanh.pop %v971
    %v981 = vtanh.pop %v973
    %v982 = vtanh.pop %v976
    %v983 = vtanh.pop %v978
    %v984 = vpack.c.bf16 %v980, %v980
    %v985 = vpack.c.bf16 %v981, %v981
    %v986 = vpack.c.bf16 %v982, %v982
    %v987 = vpack.c.bf16 %v983, %v983
    %v992 = vunpack.c.l.b16 %v984
    %v993 = vunpack.c.l.b16 %v985
    %v994 = vunpack.c.l.b16 %v986
    %v995 = vunpack.c.l.b16 %v987
    %v996 = vpack.c.b16 %v993, %v992
    %v997 = vpack.c.b16 %v995, %v994
    %v1004 = vunpack.c.l.b16 %v953
    %v1005 = vunpack.c.l.b16 %v954
    %v1006 = vunpack.c.l.b16 %v955
    %v1007 = vunpack.c.l.b16 %v956
    %v1008 = vpack.c.b16 %v1005, %v1004
    %v1009 = vpack.c.b16 %v1007, %v1006
    %1012 = vmatpush.bf16.msra.mxu0 %v886
    %1013 = vmatpush.bf16.msra.mxu0 %v885
    %1014 = vmatpush.bf16.msra.mxu0 %v884
    %1015 = vmatpush.bf16.msra.mxu0 %v883
    %1016 = vmatpush.bf16.msra.mxu0 %v882
    %1017 = vmatpush.bf16.msra.mxu0 %v881
    %1018 = vmatpush.bf16.msra.mxu0 %v880
    %1019 = vmatpush.bf16.msra.mxu0 %v879
    %1020 = vmatmul.bf16.gmra.mxu0 %v996
    %v1021 = vpop.f32.mrf.mxu0
    %v1022 = vadd.f32 %v722, %v1021
    %v1023 = vpop.f32.mrf.mxu0
    %v1024 = vadd.f32 %v722, %v1023
    %1025 = vmatmul.bf16.gmra.mxu0 %v997
    %v1026 = vpop.f32.mrf.mxu0
    %v1027 = vadd.f32 %v722, %v1026
    %v1028 = vpop.f32.mrf.mxu0
    %v1029 = vadd.f32 %v722, %v1028
    %1030 = vdwg.mxu0
    %1031 = vmatpush.bf16.msra.mxu0 %v894
    %1032 = vmatpush.bf16.msra.mxu0 %v893
    %1033 = vmatpush.bf16.msra.mxu0 %v892
    %1034 = vmatpush.bf16.msra.mxu0 %v891
    %1035 = vmatpush.bf16.msra.mxu0 %v890
    %1036 = vmatpush.bf16.msra.mxu0 %v889
    %1037 = vmatpush.bf16.msra.mxu0 %v888
    %1038 = vmatpush.bf16.msra.mxu0 %v887
    %1039 = vmatmul.bf16.gmra.mxu0 %v1008
    %v1040 = vpop.f32.mrf.mxu0
    %v1041 = vadd.f32 %v1022, %v1040
    %v1042 = vpop.f32.mrf.mxu0
    %v1043 = vadd.f32 %v1024, %v1042
    %1044 = vmatmul.bf16.gmra.mxu0 %v1009
    %v1045 = vpop.f32.mrf.mxu0
    %v1046 = vadd.f32 %v1027, %v1045
    %v1047 = vpop.f32.mrf.mxu0
    %v1048 = vadd.f32 %v1029, %v1047
    %1049 = vdwg.mxu0
    %v1050 = vtanh.pop %v1041
    %v1051 = vtanh.pop %v1043
    %v1052 = vtanh.pop %v1046
    %v1053 = vtanh.pop %v1048
    %v1054 = vpack.c.bf16 %v1050, %v1050
    %v1055 = vpack.c.bf16 %v1051, %v1051
    %v1056 = vpack.c.bf16 %v1052, %v1052
    %v1057 = vpack.c.bf16 %v1053, %v1053
    %v1058 = vld [vmem:[%s371] sm:$0xff]
    %v1059 = vld [vmem:[%s371 + $0x8] sm:$0xff]
    %v1060 = vld [vmem:[%s371 + $0x10] sm:$0xff]
    %v1061 = vld [vmem:[%s371 + $0x18] sm:$0xff]
    %1062 = vmatpush.bf16.msra.mxu0 %v767
    %1063 = vmatpush.bf16.msra.mxu0 %v766
    %1064 = vmatpush.bf16.msra.mxu0 %v765
    %1065 = vmatpush.bf16.msra.mxu0 %v764
    %1066 = vmatpush.bf16.msra.mxu0 %v763
    %1067 = vmatpush.bf16.msra.mxu0 %v762
    %1068 = vmatpush.bf16.msra.mxu0 %v761
    %1069 = vmatpush.bf16.msra.mxu0 %v760
    %1070 = vmatmul.bf16.gmra.mxu0 %v996
    %v1071 = vpop.f32.mrf.mxu0
    %v1072 = vadd.f32 %v1058, %v1071
    %v1073 = vpop.f32.mrf.mxu0
    %v1074 = vadd.f32 %v1059, %v1073
    %1075 = vmatmul.bf16.gmra.mxu0 %v997
    %v1076 = vpop.f32.mrf.mxu0
    %v1077 = vadd.f32 %v1060, %v1076
    %v1078 = vpop.f32.mrf.mxu0
    %v1079 = vadd.f32 %v1061, %v1078
    %1080 = vdwg.mxu0
    %v1081 = vtanh.pop %v1072
    %v1082 = vtanh.pop %v1074
    %v1083 = vtanh.pop %v1077
    %v1084 = vtanh.pop %v1079
    %v1085 = vpack.c.bf16 %v1081, %v1081
    %v1086 = vpack.c.bf16 %v1082, %v1082
    %v1087 = vpack.c.bf16 %v1083, %v1083
    %v1088 = vpack.c.bf16 %v1084, %v1084
    %v1093 = vunpack.c.l.b16 %v1085
    %v1094 = vunpack.c.l.b16 %v1086
    %v1095 = vunpack.c.l.b16 %v1087
    %v1096 = vunpack.c.l.b16 %v1088
    %v1097 = vpack.c.b16 %v1094, %v1093
    %v1098 = vpack.c.b16 %v1096, %v1095
    %v1105 = vunpack.c.l.b16 %v1054
    %v1106 = vunpack.c.l.b16 %v1055
    %v1107 = vunpack.c.l.b16 %v1056
    %v1108 = vunpack.c.l.b16 %v1057
    %v1109 = vpack.c.b16 %v1106, %v1105
    %v1110 = vpack.c.b16 %v1108, %v1107
    %1113 = vmatpush.bf16.msra.mxu0 %v886
    %1114 = vmatpush.bf16.msra.mxu0 %v885
    %1115 = vmatpush.bf16.msra.mxu0 %v884
    %1116 = vmatpush.bf16.msra.mxu0 %v883
    %1117 = vmatpush.bf16.msra.mxu0 %v882
    %1118 = vmatpush.bf16.msra.mxu0 %v881
    %1119 = vmatpush.bf16.msra.mxu0 %v880
    %1120 = vmatpush.bf16.msra.mxu0 %v879
    %1121 = vmatmul.bf16.gmra.mxu0 %v1097
    %v1122 = vpop.f32.mrf.mxu0
    %v1123 = vadd.f32 %v722, %v1122
    %v1124 = vpop.f32.mrf.mxu0
    %v1125 = vadd.f32 %v722, %v1124
    %1126 = vmatmul.bf16.gmra.mxu0 %v1098
    %v1127 = vpop.f32.mrf.mxu0
    %v1128 = vadd.f32 %v722, %v1127
    %v1129 = vpop.f32.mrf.mxu0
    %v1130 = vadd.f32 %v722, %v1129
    %1131 = vdwg.mxu0
    %1132 = vmatpush.bf16.msra.mxu0 %v894
    %1133 = vmatpush.bf16.msra.mxu0 %v893
    %1134 = vmatpush.bf16.msra.mxu0 %v892
    %1135 = vmatpush.bf16.msra.mxu0 %v891
    %1136 = vmatpush.bf16.msra.mxu0 %v890
    %1137 = vmatpush.bf16.msra.mxu0 %v889
    %1138 = vmatpush.bf16.msra.mxu0 %v888
    %1139 = vmatpush.bf16.msra.mxu0 %v887
    %1140 = vmatmul.bf16.gmra.mxu0 %v1109
    %v1141 = vpop.f32.mrf.mxu0
    %v1142 = vadd.f32 %v1123, %v1141
    %v1143 = vpop.f32.mrf.mxu0
    %v1144 = vadd.f32 %v1125, %v1143
    %1145 = vmatmul.bf16.gmra.mxu0 %v1110
    %v1146 = vpop.f32.mrf.mxu0
    %v1147 = vadd.f32 %v1128, %v1146
    %v1148 = vpop.f32.mrf.mxu0
    %v1149 = vadd.f32 %v1130, %v1148
    %1150 = vdwg.mxu0
    %v1151 = vtanh.pop %v1142
    %v1152 = vtanh.pop %v1144
    %v1153 = vtanh.pop %v1147
    %v1154 = vtanh.pop %v1149
    %v1155 = vpack.c.bf16 %v1151, %v1151
    %v1156 = vpack.c.bf16 %v1152, %v1152
    %v1157 = vpack.c.bf16 %v1153, %v1153
    %v1158 = vpack.c.bf16 %v1154, %v1154
    %v1159 = vld [vmem:[%s430] sm:$0xff]
    %v1160 = vld [vmem:[%s430 + $0x8] sm:$0xff]
    %v1161 = vld [vmem:[%s430 + $0x10] sm:$0xff]
    %v1162 = vld [vmem:[%s430 + $0x18] sm:$0xff]
    %1163 = vmatpush.bf16.msra.mxu0 %v767
    %1164 = vmatpush.bf16.msra.mxu0 %v766
    %1165 = vmatpush.bf16.msra.mxu0 %v765
    %1166 = vmatpush.bf16.msra.mxu0 %v764
    %1167 = vmatpush.bf16.msra.mxu0 %v763
    %1168 = vmatpush.bf16.msra.mxu0 %v762
    %1169 = vmatpush.bf16.msra.mxu0 %v761
    %1170 = vmatpush.bf16.msra.mxu0 %v760
    %1171 = vmatmul.bf16.gmra.mxu0 %v1097
    %v1172 = vpop.f32.mrf.mxu0
    %v1173 = vadd.f32 %v1159, %v1172
    %v1174 = vpop.f32.mrf.mxu0
    %v1175 = vadd.f32 %v1160, %v1174
    %1176 = vmatmul.bf16.gmra.mxu0 %v1098
    %v1177 = vpop.f32.mrf.mxu0
    %v1178 = vadd.f32 %v1161, %v1177
    %v1179 = vpop.f32.mrf.mxu0
    %v1180 = vadd.f32 %v1162, %v1179
    %1181 = vdwg.mxu0
    %v1182 = vtanh.pop %v1173
    %v1183 = vtanh.pop %v1175
    %v1184 = vtanh.pop %v1178
    %v1185 = vtanh.pop %v1180
    %v1186 = vpack.c.bf16 %v1182, %v1182
    %v1187 = vpack.c.bf16 %v1183, %v1183
    %v1188 = vpack.c.bf16 %v1184, %v1184
    %v1189 = vpack.c.bf16 %v1185, %v1185
    %v1194 = vunpack.c.l.b16 %v1186
    %v1195 = vunpack.c.l.b16 %v1187
    %v1196 = vunpack.c.l.b16 %v1188
    %v1197 = vunpack.c.l.b16 %v1189
    %v1198 = vpack.c.b16 %v1195, %v1194
    %v1199 = vpack.c.b16 %v1197, %v1196
    %v1206 = vunpack.c.l.b16 %v1155
    %v1207 = vunpack.c.l.b16 %v1156
    %v1208 = vunpack.c.l.b16 %v1157
    %v1209 = vunpack.c.l.b16 %v1158
    %v1210 = vpack.c.b16 %v1207, %v1206
    %v1211 = vpack.c.b16 %v1209, %v1208
    %1214 = vmatpush.bf16.msra.mxu0 %v886
    %1215 = vmatpush.bf16.msra.mxu0 %v885
    %1216 = vmatpush.bf16.msra.mxu0 %v884
    %1217 = vmatpush.bf16.msra.mxu0 %v883
    %1218 = vmatpush.bf16.msra.mxu0 %v882
    %1219 = vmatpush.bf16.msra.mxu0 %v881
    %1220 = vmatpush.bf16.msra.mxu0 %v880
    %1221 = vmatpush.bf16.msra.mxu0 %v879
    %1222 = vmatmul.bf16.gmra.mxu0 %v1198
    %v1223 = vpop.f32.mrf.mxu0
    %v1224 = vadd.f32 %v722, %v1223
    %v1225 = vpop.f32.mrf.mxu0
    %v1226 = vadd.f32 %v722, %v1225
    %1227 = vmatmul.bf16.gmra.mxu0 %v1199
    %v1228 = vpop.f32.mrf.mxu0
    %v1229 = vadd.f32 %v722, %v1228
    %v1230 = vpop.f32.mrf.mxu0
    %v1231 = vadd.f32 %v722, %v1230
    %1232 = vdwg.mxu0
    %1233 = vmatpush.bf16.msra.mxu0 %v894
    %1234 = vmatpush.bf16.msra.mxu0 %v893
    %1235 = vmatpush.bf16.msra.mxu0 %v892
    %1236 = vmatpush.bf16.msra.mxu0 %v891
    %1237 = vmatpush.bf16.msra.mxu0 %v890
    %1238 = vmatpush.bf16.msra.mxu0 %v889
    %1239 = vmatpush.bf16.msra.mxu0 %v888
    %1240 = vmatpush.bf16.msra.mxu0 %v887
    %1241 = vmatmul.bf16.gmra.mxu0 %v1210
    %v1242 = vpop.f32.mrf.mxu0
    %v1243 = vadd.f32 %v1224, %v1242
    %v1244 = vpop.f32.mrf.mxu0
    %v1245 = vadd.f32 %v1226, %v1244
    %1246 = vmatmul.bf16.gmra.mxu0 %v1211
    %v1247 = vpop.f32.mrf.mxu0
    %v1248 = vadd.f32 %v1229, %v1247
    %v1249 = vpop.f32.mrf.mxu0
    %v1250 = vadd.f32 %v1231, %v1249
    %1251 = vdwg.mxu0
    %v1252 = vtanh.pop %v1243
    %v1253 = vtanh.pop %v1245
    %v1254 = vtanh.pop %v1248
    %v1255 = vtanh.pop %v1250
    %v1256 = vpack.c.bf16 %v1252, %v1252
    %v1257 = vpack.c.bf16 %v1253, %v1253
    %v1258 = vpack.c.bf16 %v1254, %v1254
    %v1259 = vpack.c.bf16 %v1255, %v1255
    %v1260 = vld [vmem:[%s489] sm:$0xff]
    %v1261 = vld [vmem:[%s489 + $0x8] sm:$0xff]
    %v1262 = vld [vmem:[%s489 + $0x10] sm:$0xff]
    %v1263 = vld [vmem:[%s489 + $0x18] sm:$0xff]
    %1264 = vmatpush.bf16.msra.mxu0 %v767
    %1265 = vmatpush.bf16.msra.mxu0 %v766
    %1266 = vmatpush.bf16.msra.mxu0 %v765
    %1267 = vmatpush.bf16.msra.mxu0 %v764
    %1268 = vmatpush.bf16.msra.mxu0 %v763
    %1269 = vmatpush.bf16.msra.mxu0 %v762
    %1270 = vmatpush.bf16.msra.mxu0 %v761
    %1271 = vmatpush.bf16.msra.mxu0 %v760
    %1272 = vmatmul.bf16.gmra.mxu0 %v1198
    %v1273 = vpop.f32.mrf.mxu0
    %v1274 = vadd.f32 %v1260, %v1273
    %v1275 = vpop.f32.mrf.mxu0
    %v1276 = vadd.f32 %v1261, %v1275
    %1277 = vmatmul.bf16.gmra.mxu0 %v1199
    %v1278 = vpop.f32.mrf.mxu0
    %v1279 = vadd.f32 %v1262, %v1278
    %v1280 = vpop.f32.mrf.mxu0
    %v1281 = vadd.f32 %v1263, %v1280
    %1282 = vdwg.mxu0
    %v1283 = vtanh.pop %v1274
    %v1284 = vtanh.pop %v1276
    %v1285 = vtanh.pop %v1279
    %v1286 = vtanh.pop %v1281
    %v1287 = vpack.c.bf16 %v1283, %v1283
    %v1288 = vpack.c.bf16 %v1284, %v1284
    %v1289 = vpack.c.bf16 %v1285, %v1285
    %v1290 = vpack.c.bf16 %v1286, %v1286
    %v1295 = vunpack.c.l.b16 %v1287
    %v1296 = vunpack.c.l.b16 %v1288
    %v1297 = vunpack.c.l.b16 %v1289
    %v1298 = vunpack.c.l.b16 %v1290
    %v1299 = vpack.c.b16 %v1296, %v1295
    %v1300 = vpack.c.b16 %v1298, %v1297
    %v1307 = vunpack.c.l.b16 %v1256
    %v1308 = vunpack.c.l.b16 %v1257
    %v1309 = vunpack.c.l.b16 %v1258
    %v1310 = vunpack.c.l.b16 %v1259
    %v1311 = vpack.c.b16 %v1308, %v1307
    %v1312 = vpack.c.b16 %v1310, %v1309
    %1315 = vmatpush.bf16.msra.mxu0 %v886
    %1316 = vmatpush.bf16.msra.mxu0 %v885
    %1317 = vmatpush.bf16.msra.mxu0 %v884
    %1318 = vmatpush.bf16.msra.mxu0 %v883
    %1319 = vmatpush.bf16.msra.mxu0 %v882
    %1320 = vmatpush.bf16.msra.mxu0 %v881
    %1321 = vmatpush.bf16.msra.mxu0 %v880
    %1322 = vmatpush.bf16.msra.mxu0 %v879
    %1323 = vmatmul.bf16.gmra.mxu0 %v1299
    %v1324 = vpop.f32.mrf.mxu0
    %v1325 = vadd.f32 %v722, %v1324
    %v1326 = vpop.f32.mrf.mxu0
    %v1327 = vadd.f32 %v722, %v1326
    %1328 = vmatmul.bf16.gmra.mxu0 %v1300
    %v1329 = vpop.f32.mrf.mxu0
    %v1330 = vadd.f32 %v722, %v1329
    %v1331 = vpop.f32.mrf.mxu0
    %v1332 = vadd.f32 %v722, %v1331
    %1333 = vdwg.mxu0
    %1334 = vmatpush.bf16.msra.mxu0 %v894
    %1335 = vmatpush.bf16.msra.mxu0 %v893
    %1336 = vmatpush.bf16.msra.mxu0 %v892
    %1337 = vmatpush.bf16.msra.mxu0 %v891
    %1338 = vmatpush.bf16.msra.mxu0 %v890
    %1339 = vmatpush.bf16.msra.mxu0 %v889
    %1340 = vmatpush.bf16.msra.mxu0 %v888
    %1341 = vmatpush.bf16.msra.mxu0 %v887
    %1342 = vmatmul.bf16.gmra.mxu0 %v1311
    %v1343 = vpop.f32.mrf.mxu0
    %v1344 = vadd.f32 %v1325, %v1343
    %v1345 = vpop.f32.mrf.mxu0
    %v1346 = vadd.f32 %v1327, %v1345
    %1347 = vmatmul.bf16.gmra.mxu0 %v1312
    %v1348 = vpop.f32.mrf.mxu0
    %v1349 = vadd.f32 %v1330, %v1348
    %v1350 = vpop.f32.mrf.mxu0
    %v1351 = vadd.f32 %v1332, %v1350
    %1352 = vdwg.mxu0
    %v1353 = vtanh.pop %v1344
    %v1354 = vtanh.pop %v1346
    %v1355 = vtanh.pop %v1349
    %v1356 = vtanh.pop %v1351
    %v1357 = vpack.c.bf16 %v1353, %v1353
    %v1358 = vpack.c.bf16 %v1354, %v1354
    %v1359 = vpack.c.bf16 %v1355, %v1355
    %v1360 = vpack.c.bf16 %v1356, %v1356
    %v1361 = vld [vmem:[%s548] sm:$0xff]
    %v1362 = vld [vmem:[%s548 + $0x8] sm:$0xff]
    %v1363 = vld [vmem:[%s548 + $0x10] sm:$0xff]
    %v1364 = vld [vmem:[%s548 + $0x18] sm:$0xff]
    %1365 = vmatpush.bf16.msra.mxu0 %v767
    %1366 = vmatpush.bf16.msra.mxu0 %v766
    %1367 = vmatpush.bf16.msra.mxu0 %v765
    %1368 = vmatpush.bf16.msra.mxu0 %v764
    %1369 = vmatpush.bf16.msra.mxu0 %v763
    %1370 = vmatpush.bf16.msra.mxu0 %v762
    %1371 = vmatpush.bf16.msra.mxu0 %v761
    %1372 = vmatpush.bf16.msra.mxu0 %v760
    %1373 = vmatmul.bf16.gmra.mxu0 %v1299
    %v1374 = vpop.f32.mrf.mxu0
    %v1375 = vadd.f32 %v1361, %v1374
    %v1376 = vpop.f32.mrf.mxu0
    %v1377 = vadd.f32 %v1362, %v1376
    %1378 = vmatmul.bf16.gmra.mxu0 %v1300
    %v1379 = vpop.f32.mrf.mxu0
    %v1380 = vadd.f32 %v1363, %v1379
    %v1381 = vpop.f32.mrf.mxu0
    %v1382 = vadd.f32 %v1364, %v1381
    %1383 = vdwg.mxu0
    %v1384 = vtanh.pop %v1375
    %v1385 = vtanh.pop %v1377
    %v1386 = vtanh.pop %v1380
    %v1387 = vtanh.pop %v1382
    %v1388 = vpack.c.bf16 %v1384, %v1384
    %v1389 = vpack.c.bf16 %v1385, %v1385
    %v1390 = vpack.c.bf16 %v1386, %v1386
    %v1391 = vpack.c.bf16 %v1387, %v1387
    %v1396 = vunpack.c.l.b16 %v1388
    %v1397 = vunpack.c.l.b16 %v1389
    %v1398 = vunpack.c.l.b16 %v1390
    %v1399 = vunpack.c.l.b16 %v1391
    %v1400 = vpack.c.b16 %v1397, %v1396
    %v1401 = vpack.c.b16 %v1399, %v1398
    %v1408 = vunpack.c.l.b16 %v1357
    %v1409 = vunpack.c.l.b16 %v1358
    %v1410 = vunpack.c.l.b16 %v1359
    %v1411 = vunpack.c.l.b16 %v1360
    %v1412 = vpack.c.b16 %v1409, %v1408
    %v1413 = vpack.c.b16 %v1411, %v1410
    %1416 = vmatpush.bf16.msra.mxu0 %v886
    %1417 = vmatpush.bf16.msra.mxu0 %v885
    %1418 = vmatpush.bf16.msra.mxu0 %v884
    %1419 = vmatpush.bf16.msra.mxu0 %v883
    %1420 = vmatpush.bf16.msra.mxu0 %v882
    %1421 = vmatpush.bf16.msra.mxu0 %v881
    %1422 = vmatpush.bf16.msra.mxu0 %v880
    %1423 = vmatpush.bf16.msra.mxu0 %v879
    %1424 = vmatmul.bf16.gmra.mxu0 %v1400
    %v1425 = vpop.f32.mrf.mxu0
    %v1426 = vadd.f32 %v722, %v1425
    %v1427 = vpop.f32.mrf.mxu0
    %v1428 = vadd.f32 %v722, %v1427
    %1429 = vmatmul.bf16.gmra.mxu0 %v1401
    %v1430 = vpop.f32.mrf.mxu0
    %v1431 = vadd.f32 %v722, %v1430
    %v1432 = vpop.f32.mrf.mxu0
    %v1433 = vadd.f32 %v722, %v1432
    %1434 = vdwg.mxu0
    %1435 = vmatpush.bf16.msra.mxu0 %v894
    %1436 = vmatpush.bf16.msra.mxu0 %v893
    %1437 = vmatpush.bf16.msra.mxu0 %v892
    %1438 = vmatpush.bf16.msra.mxu0 %v891
    %1439 = vmatpush.bf16.msra.mxu0 %v890
    %1440 = vmatpush.bf16.msra.mxu0 %v889
    %1441 = vmatpush.bf16.msra.mxu0 %v888
    %1442 = vmatpush.bf16.msra.mxu0 %v887
    %1443 = vmatmul.bf16.gmra.mxu0 %v1412
    %v1444 = vpop.f32.mrf.mxu0
    %v1445 = vadd.f32 %v1426, %v1444
    %v1446 = vpop.f32.mrf.mxu0
    %v1447 = vadd.f32 %v1428, %v1446
    %1448 = vmatmul.bf16.gmra.mxu0 %v1413
    %v1449 = vpop.f32.mrf.mxu0
    %v1450 = vadd.f32 %v1431, %v1449
    %v1451 = vpop.f32.mrf.mxu0
    %v1452 = vadd.f32 %v1433, %v1451
    %1453 = vdwg.mxu0
    %v1454 = vtanh.pop %v1445
    %v1455 = vtanh.pop %v1447
    %v1456 = vtanh.pop %v1450
    %v1457 = vtanh.pop %v1452
    %v1458 = vpack.c.bf16 %v1454, %v1454
    %v1459 = vpack.c.bf16 %v1455, %v1455
    %v1460 = vpack.c.bf16 %v1456, %v1456
    %v1461 = vpack.c.bf16 %v1457, %v1457
    %v1462 = vld [vmem:[%s607] sm:$0xff]
    %v1463 = vld [vmem:[%s607 + $0x8] sm:$0xff]
    %v1464 = vld [vmem:[%s607 + $0x10] sm:$0xff]
    %v1465 = vld [vmem:[%s607 + $0x18] sm:$0xff]
    %1466 = vmatpush.bf16.msra.mxu0 %v767
    %1467 = vmatpush.bf16.msra.mxu0 %v766
    %1468 = vmatpush.bf16.msra.mxu0 %v765
    %1469 = vmatpush.bf16.msra.mxu0 %v764
    %1470 = vmatpush.bf16.msra.mxu0 %v763
    %1471 = vmatpush.bf16.msra.mxu0 %v762
    %1472 = vmatpush.bf16.msra.mxu0 %v761
    %1473 = vmatpush.bf16.msra.mxu0 %v760
    %1474 = vmatmul.bf16.gmra.mxu0 %v1400
    %v1475 = vpop.f32.mrf.mxu0
    %v1476 = vadd.f32 %v1462, %v1475
    %v1477 = vpop.f32.mrf.mxu0
    %v1478 = vadd.f32 %v1463, %v1477
    %1479 = vmatmul.bf16.gmra.mxu0 %v1401
    %v1480 = vpop.f32.mrf.mxu0
    %v1481 = vadd.f32 %v1464, %v1480
    %v1482 = vpop.f32.mrf.mxu0
    %v1483 = vadd.f32 %v1465, %v1482
    %1484 = vdwg.mxu0
    %v1485 = vtanh.pop %v1476
    %v1486 = vtanh.pop %v1478
    %v1487 = vtanh.pop %v1481
    %v1488 = vtanh.pop %v1483
    %v1489 = vpack.c.bf16 %v1485, %v1485
    %v1490 = vpack.c.bf16 %v1486, %v1486
    %v1491 = vpack.c.bf16 %v1487, %v1487
    %v1492 = vpack.c.bf16 %v1488, %v1488
    %v1497 = vunpack.c.l.b16 %v1489
    %v1498 = vunpack.c.l.b16 %v1490
    %v1499 = vunpack.c.l.b16 %v1491
    %v1500 = vunpack.c.l.b16 %v1492
    %v1501 = vpack.c.b16 %v1498, %v1497
    %v1502 = vpack.c.b16 %v1500, %v1499
    %v1509 = vunpack.c.l.b16 %v1458
    %v1510 = vunpack.c.l.b16 %v1459
    %v1511 = vunpack.c.l.b16 %v1460
    %v1512 = vunpack.c.l.b16 %v1461
    %v1513 = vpack.c.b16 %v1510, %v1509
    %v1514 = vpack.c.b16 %v1512, %v1511
    %1517 = vmatpush.bf16.msra.mxu0 %v886
    %1518 = vmatpush.bf16.msra.mxu0 %v885
    %1519 = vmatpush.bf16.msra.mxu0 %v884
    %1520 = vmatpush.bf16.msra.mxu0 %v883
    %1521 = vmatpush.bf16.msra.mxu0 %v882
    %1522 = vmatpush.bf16.msra.mxu0 %v881
    %1523 = vmatpush.bf16.msra.mxu0 %v880
    %1524 = vmatpush.bf16.msra.mxu0 %v879
    %1525 = vmatmul.bf16.gmra.mxu0 %v1501
    %v1526 = vpop.f32.mrf.mxu0
    %v1527 = vadd.f32 %v722, %v1526
    %v1528 = vpop.f32.mrf.mxu0
    %v1529 = vadd.f32 %v722, %v1528
    %1530 = vmatmul.bf16.gmra.mxu0 %v1502
    %v1531 = vpop.f32.mrf.mxu0
    %v1532 = vadd.f32 %v722, %v1531
    %v1533 = vpop.f32.mrf.mxu0
    %v1534 = vadd.f32 %v722, %v1533
    %1535 = vdwg.mxu0
    %1536 = vmatpush.bf16.msra.mxu0 %v894
    %1537 = vmatpush.bf16.msra.mxu0 %v893
    %1538 = vmatpush.bf16.msra.mxu0 %v892
    %1539 = vmatpush.bf16.msra.mxu0 %v891
    %1540 = vmatpush.bf16.msra.mxu0 %v890
    %1541 = vmatpush.bf16.msra.mxu0 %v889
    %1542 = vmatpush.bf16.msra.mxu0 %v888
    %1543 = vmatpush.bf16.msra.mxu0 %v887
    %1544 = vmatmul.bf16.gmra.mxu0 %v1513
    %v1545 = vpop.f32.mrf.mxu0
    %v1546 = vadd.f32 %v1527, %v1545
    %v1547 = vpop.f32.mrf.mxu0
    %v1548 = vadd.f32 %v1529, %v1547
    %1549 = vmatmul.bf16.gmra.mxu0 %v1514
    %v1550 = vpop.f32.mrf.mxu0
    %v1551 = vadd.f32 %v1532, %v1550
    %v1552 = vpop.f32.mrf.mxu0
    %v1553 = vadd.f32 %v1534, %v1552
    %1554 = vdwg.mxu0
    %v1555 = vtanh.pop %v1546
    %v1556 = vtanh.pop %v1548
    %v1557 = vtanh.pop %v1551
    %v1558 = vtanh.pop %v1553
    %v1559 = vpack.c.bf16 %v1555, %v1555
    %v1560 = vpack.c.bf16 %v1556, %v1556
    %v1561 = vpack.c.bf16 %v1557, %v1557
    %v1562 = vpack.c.bf16 %v1558, %v1558
    %v1563 = vld [vmem:[%s666] sm:$0xff]
    %v1564 = vld [vmem:[%s666 + $0x8] sm:$0xff]
    %v1565 = vld [vmem:[%s666 + $0x10] sm:$0xff]
    %v1566 = vld [vmem:[%s666 + $0x18] sm:$0xff]
    %1567 = vmatpush.bf16.msra.mxu0 %v767
    %1568 = vmatpush.bf16.msra.mxu0 %v766
    %1569 = vmatpush.bf16.msra.mxu0 %v765
    %1570 = vmatpush.bf16.msra.mxu0 %v764
    %1571 = vmatpush.bf16.msra.mxu0 %v763
    %1572 = vmatpush.bf16.msra.mxu0 %v762
    %1573 = vmatpush.bf16.msra.mxu0 %v761
    %1574 = vmatpush.bf16.msra.mxu0 %v760
    %1575 = vmatmul.bf16.gmra.mxu0 %v1501
    %v1576 = vpop.f32.mrf.mxu0
    %v1577 = vadd.f32 %v1563, %v1576
    %v1578 = vpop.f32.mrf.mxu0
    %v1579 = vadd.f32 %v1564, %v1578
    %1580 = vmatmul.bf16.gmra.mxu0 %v1502
    %v1581 = vpop.f32.mrf.mxu0
    %v1582 = vadd.f32 %v1565, %v1581
    %v1583 = vpop.f32.mrf.mxu0
    %v1584 = vadd.f32 %v1566, %v1583
    %1585 = vdwg.mxu0
    %v1586 = vtanh.pop %v1577
    %v1587 = vtanh.pop %v1579
    %v1588 = vtanh.pop %v1582
    %v1589 = vtanh.pop %v1584
    %v1590 = vpack.c.bf16 %v1586, %v1586
    %v1591 = vpack.c.bf16 %v1587, %v1587
    %v1592 = vpack.c.bf16 %v1588, %v1588
    %v1593 = vpack.c.bf16 %v1589, %v1589
    %v1598 = vunpack.c.l.b16 %v1590
    %v1599 = vunpack.c.l.b16 %v1591
    %v1600 = vunpack.c.l.b16 %v1592
    %v1601 = vunpack.c.l.b16 %v1593
    %v1602 = vpack.c.b16 %v1599, %v1598
    %v1603 = vpack.c.b16 %v1601, %v1600
    %v1610 = vunpack.c.l.b16 %v1559
    %v1611 = vunpack.c.l.b16 %v1560
    %v1612 = vunpack.c.l.b16 %v1561
    %v1613 = vunpack.c.l.b16 %v1562
    %v1614 = vpack.c.b16 %v1611, %v1610
    %v1615 = vpack.c.b16 %v1613, %v1612
    %1618 = vmatpush.bf16.msra.mxu0 %v886
    %1619 = vmatpush.bf16.msra.mxu0 %v885
    %1620 = vmatpush.bf16.msra.mxu0 %v884
    %1621 = vmatpush.bf16.msra.mxu0 %v883
    %1622 = vmatpush.bf16.msra.mxu0 %v882
    %1623 = vmatpush.bf16.msra.mxu0 %v881
    %1624 = vmatpush.bf16.msra.mxu0 %v880
    %1625 = vmatpush.bf16.msra.mxu0 %v879
    %1626 = vmatmul.bf16.gmra.mxu0 %v1602
    %v1627 = vpop.f32.mrf.mxu0
    %v1628 = vadd.f32 %v722, %v1627
    %v1629 = vpop.f32.mrf.mxu0
    %v1630 = vadd.f32 %v722, %v1629
    %1631 = vmatmul.bf16.gmra.mxu0 %v1603
    %v1632 = vpop.f32.mrf.mxu0
    %v1633 = vadd.f32 %v722, %v1632
    %v1634 = vpop.f32.mrf.mxu0
    %v1635 = vadd.f32 %v722, %v1634
    %1636 = vdwg.mxu0
    %1637 = vmatpush.bf16.msra.mxu0 %v894
    %1638 = vmatpush.bf16.msra.mxu0 %v893
    %1639 = vmatpush.bf16.msra.mxu0 %v892
    %1640 = vmatpush.bf16.msra.mxu0 %v891
    %1641 = vmatpush.bf16.msra.mxu0 %v890
    %1642 = vmatpush.bf16.msra.mxu0 %v889
    %1643 = vmatpush.bf16.msra.mxu0 %v888
    %1644 = vmatpush.bf16.msra.mxu0 %v887
    %1645 = vmatmul.bf16.gmra.mxu0 %v1614
    %v1646 = vpop.f32.mrf.mxu0
    %v1647 = vadd.f32 %v1628, %v1646
    %v1648 = vpop.f32.mrf.mxu0
    %v1649 = vadd.f32 %v1630, %v1648
    %1650 = vmatmul.bf16.gmra.mxu0 %v1615
    %v1651 = vpop.f32.mrf.mxu0
    %v1652 = vadd.f32 %v1633, %v1651
    %v1653 = vpop.f32.mrf.mxu0
    %v1654 = vadd.f32 %v1635, %v1653
    %1655 = vdwg.mxu0
    %v1656 = vtanh.pop %v1647
    %v1657 = vtanh.pop %v1649
    %v1658 = vtanh.pop %v1652
    %v1659 = vtanh.pop %v1654
    %v1660 = vpack.c.bf16 %v1657, %v1656
    %v1661 = vpack.c.bf16 %v1659, %v1658
    %v1662 = vld [vmem:[#allocation12] sm:$0xf]
    %v1663 = vld [vmem:[#allocation12 + $0x4] sm:$0xf]
    %v1664 = vld [vmem:[#allocation12 + $0x8] sm:$0xf]
    %v1665 = vld [vmem:[#allocation12 + $0xc] sm:$0xf]
    %v1666 = vld [vmem:[#allocation12 + $0x10] sm:$0xf]
    %v1667 = vld [vmem:[#allocation12 + $0x14] sm:$0xf]
    %v1668 = vld [vmem:[#allocation12 + $0x18] sm:$0xf]
    %v1669 = vld [vmem:[#allocation12 + $0x1c] sm:$0xf]
    %v1670 = vld [vmem:[#allocation12 + $0x20] sm:$0xf]
    %v1671 = vld [vmem:[#allocation12 + $0x24] sm:$0xf]
    %v1672 = vld [vmem:[#allocation12 + $0x28] sm:$0xf]
    %v1673 = vld [vmem:[#allocation12 + $0x2c] sm:$0xf]
    %v1674 = vld [vmem:[#allocation12 + $0x30] sm:$0xf]
    %v1675 = vld [vmem:[#allocation12 + $0x34] sm:$0xf]
    %v1676 = vld [vmem:[#allocation12 + $0x38] sm:$0xf]
    %v1677 = vld [vmem:[#allocation12 + $0x3c] sm:$0xf]
    %v1678 = vld [vmem:[%s7] sm:$0x1]
    %v1680 = vperm.slane %v1678, 0
    %v1698 = vunpack.c.l.b16 %v1662
    %v1699 = vunpack.c.l.b16 %v1663
    %v1700 = vunpack.c.l.b16 %v1664
    %v1701 = vunpack.c.l.b16 %v1665
    %v1702 = vunpack.c.l.b16 %v1666
    %v1703 = vunpack.c.l.b16 %v1667
    %v1704 = vunpack.c.l.b16 %v1668
    %v1705 = vunpack.c.l.b16 %v1669
    %v1706 = vunpack.c.l.b16 %v1670
    %v1707 = vunpack.c.l.b16 %v1671
    %v1708 = vunpack.c.l.b16 %v1672
    %v1709 = vunpack.c.l.b16 %v1673
    %v1710 = vunpack.c.l.b16 %v1674
    %v1711 = vunpack.c.l.b16 %v1675
    %v1712 = vunpack.c.l.b16 %v1676
    %v1713 = vunpack.c.l.b16 %v1677
    %v1714 = vpack.c.b16 %v1699, %v1698
    %v1715 = vpack.c.b16 %v1701, %v1700
    %v1716 = vpack.c.b16 %v1703, %v1702
    %v1717 = vpack.c.b16 %v1705, %v1704
    %v1718 = vpack.c.b16 %v1707, %v1706
    %v1719 = vpack.c.b16 %v1709, %v1708
    %v1720 = vpack.c.b16 %v1711, %v1710
    %v1721 = vpack.c.b16 %v1713, %v1712
    %1730 = vmatpush.bf16.msra.mxu0 %v1721
    %1731 = vmatpush.bf16.msra.mxu0 %v1720
    %1732 = vmatpush.bf16.msra.mxu0 %v1719
    %1733 = vmatpush.bf16.msra.mxu0 %v1718
    %1734 = vmatpush.bf16.msra.mxu0 %v1717
    %1735 = vmatpush.bf16.msra.mxu0 %v1716
    %1736 = vmatpush.bf16.msra.mxu0 %v1715
    %1737 = vmatpush.bf16.msra.mxu0 %v1714
    %1738 = vmatmul.bf16.gmra.mxu0 %v1660
    %v1739 = vpop.f32.mrf.mxu0
    %v1740 = vadd.f32 %v1680, %v1739
    %v1741 = vpop.f32.mrf.mxu0
    %v1742 = vadd.f32 %v1680, %v1741
    %1743 = vmatmul.bf16.gmra.mxu0 %v1661
    %v1744 = vpop.f32.mrf.mxu0
    %v1745 = vadd.f32 %v1680, %v1744
    %v1746 = vpop.f32.mrf.mxu0
    %v1747 = vadd.f32 %v1680, %v1746
    %1748 = vdwg.mxu0
    %v1749 = vtanh.pop %v1740
    %v1750 = vtanh.pop %v1742
    %v1751 = vtanh.pop %v1745
    %v1752 = vtanh.pop %v1747
    %v1753 = vsub.f32 %v1749, %v1751
    %v1754 = vsub.f32 %v1750, %v1752
    %v1755 = vand.u32 2147483647, %v1753
    %v1756 = vand.u32 2147483647, %v1754
    %v1757 = vmul.f32 %v1749, %v1751
    %v1758 = vmul.f32 %v1750, %v1752
    %v1759 = vpack.c.bf16 %v1756, %v1755
    %v1760 = vpack.c.bf16 %v1758, %v1757
    %v1761 = vld [vmem:[#allocation14] sm:$0xf]
    %v1762 = vld [vmem:[#allocation14 + $0x4] sm:$0xf]
    %v1763 = vld [vmem:[#allocation14 + $0x8] sm:$0xf]
    %v1764 = vld [vmem:[#allocation14 + $0xc] sm:$0xf]
    %v1765 = vld [vmem:[#allocation14 + $0x10] sm:$0xf]
    %v1766 = vld [vmem:[#allocation14 + $0x14] sm:$0xf]
    %v1767 = vld [vmem:[#allocation14 + $0x18] sm:$0xf]
    %v1768 = vld [vmem:[#allocation14 + $0x1c] sm:$0xf]
    %v1769 = vld [vmem:[#allocation14 + $0x20] sm:$0xf]
    %v1770 = vld [vmem:[#allocation14 + $0x24] sm:$0xf]
    %v1771 = vld [vmem:[#allocation14 + $0x28] sm:$0xf]
    %v1772 = vld [vmem:[#allocation14 + $0x2c] sm:$0xf]
    %v1773 = vld [vmem:[#allocation14 + $0x30] sm:$0xf]
    %v1774 = vld [vmem:[#allocation14 + $0x34] sm:$0xf]
    %v1775 = vld [vmem:[#allocation14 + $0x38] sm:$0xf]
    %v1776 = vld [vmem:[#allocation14 + $0x3c] sm:$0xf]
    %v1777 = vld [vmem:[#allocation14 + $0x40] sm:$0xf]
    %v1778 = vld [vmem:[#allocation14 + $0x44] sm:$0xf]
    %v1779 = vld [vmem:[#allocation14 + $0x48] sm:$0xf]
    %v1780 = vld [vmem:[#allocation14 + $0x4c] sm:$0xf]
    %v1781 = vld [vmem:[#allocation14 + $0x50] sm:$0xf]
    %v1782 = vld [vmem:[#allocation14 + $0x54] sm:$0xf]
    %v1783 = vld [vmem:[#allocation14 + $0x58] sm:$0xf]
    %v1784 = vld [vmem:[#allocation14 + $0x5c] sm:$0xf]
    %v1785 = vld [vmem:[#allocation14 + $0x60] sm:$0xf]
    %v1786 = vld [vmem:[#allocation14 + $0x64] sm:$0xf]
    %v1787 = vld [vmem:[#allocation14 + $0x68] sm:$0xf]
    %v1788 = vld [vmem:[#allocation14 + $0x6c] sm:$0xf]
    %v1789 = vld [vmem:[#allocation14 + $0x70] sm:$0xf]
    %v1790 = vld [vmem:[#allocation14 + $0x74] sm:$0xf]
    %v1791 = vld [vmem:[#allocation14 + $0x78] sm:$0xf]
    %v1792 = vld [vmem:[#allocation14 + $0x7c] sm:$0xf]
    %v1793 = vld [vmem:[%s9] sm:$0x1]
    %v1795 = vperm.slane %v1793, 0
    %v1829 = vunpack.c.l.b16 %v1761
    %v1830 = vunpack.c.l.b16 %v1762
    %v1831 = vunpack.c.l.b16 %v1763
    %v1832 = vunpack.c.l.b16 %v1764
    %v1833 = vunpack.c.l.b16 %v1765
    %v1834 = vunpack.c.l.b16 %v1766
    %v1835 = vunpack.c.l.b16 %v1767
    %v1836 = vunpack.c.l.b16 %v1768
    %v1837 = vunpack.c.l.b16 %v1769
    %v1838 = vunpack.c.l.b16 %v1770
    %v1839 = vunpack.c.l.b16 %v1771
    %v1840 = vunpack.c.l.b16 %v1772
    %v1841 = vunpack.c.l.b16 %v1773
    %v1842 = vunpack.c.l.b16 %v1774
    %v1843 = vunpack.c.l.b16 %v1775
    %v1844 = vunpack.c.l.b16 %v1776
    %v1845 = vunpack.c.l.b16 %v1777
    %v1846 = vunpack.c.l.b16 %v1778
    %v1847 = vunpack.c.l.b16 %v1779
    %v1848 = vunpack.c.l.b16 %v1780
    %v1849 = vunpack.c.l.b16 %v1781
    %v1850 = vunpack.c.l.b16 %v1782
    %v1851 = vunpack.c.l.b16 %v1783
    %v1852 = vunpack.c.l.b16 %v1784
    %v1853 = vunpack.c.l.b16 %v1785
    %v1854 = vunpack.c.l.b16 %v1786
    %v1855 = vunpack.c.l.b16 %v1787
    %v1856 = vunpack.c.l.b16 %v1788
    %v1857 = vunpack.c.l.b16 %v1789
    %v1858 = vunpack.c.l.b16 %v1790
    %v1859 = vunpack.c.l.b16 %v1791
    %v1860 = vunpack.c.l.b16 %v1792
    %v1861 = vpack.c.b16 %v1830, %v1829
    %v1862 = vpack.c.b16 %v1832, %v1831
    %v1863 = vpack.c.b16 %v1834, %v1833
    %v1864 = vpack.c.b16 %v1836, %v1835
    %v1865 = vpack.c.b16 %v1838, %v1837
    %v1866 = vpack.c.b16 %v1840, %v1839
    %v1867 = vpack.c.b16 %v1842, %v1841
    %v1868 = vpack.c.b16 %v1844, %v1843
    %v1869 = vpack.c.b16 %v1846, %v1845
    %v1870 = vpack.c.b16 %v1848, %v1847
    %v1871 = vpack.c.b16 %v1850, %v1849
    %v1872 = vpack.c.b16 %v1852, %v1851
    %v1873 = vpack.c.b16 %v1854, %v1853
    %v1874 = vpack.c.b16 %v1856, %v1855
    %v1875 = vpack.c.b16 %v1858, %v1857
    %v1876 = vpack.c.b16 %v1860, %v1859
    %1893 = vmatpush.bf16.msra.mxu0 %v1868
    %1894 = vmatpush.bf16.msra.mxu0 %v1867
    %1895 = vmatpush.bf16.msra.mxu0 %v1866
    %1896 = vmatpush.bf16.msra.mxu0 %v1865
    %1897 = vmatpush.bf16.msra.mxu0 %v1864
    %1898 = vmatpush.bf16.msra.mxu0 %v1863
    %1899 = vmatpush.bf16.msra.mxu0 %v1862
    %1900 = vmatpush.bf16.msra.mxu0 %v1861
    %1901 = vmatmul.bf16.gmra.mxu0 %v1759
    %v1902 = vpop.f32.mrf.mxu0
    %v1903 = vadd.f32 %v1795, %v1902
    %v1904 = vpop.f32.mrf.mxu0
    %v1905 = vadd.f32 %v1795, %v1904
    %1906 = vdwg.mxu0
    %1907 = vmatpush.bf16.msra.mxu0 %v1876
    %1908 = vmatpush.bf16.msra.mxu0 %v1875
    %1909 = vmatpush.bf16.msra.mxu0 %v1874
    %1910 = vmatpush.bf16.msra.mxu0 %v1873
    %1911 = vmatpush.bf16.msra.mxu0 %v1872
    %1912 = vmatpush.bf16.msra.mxu0 %v1871
    %1913 = vmatpush.bf16.msra.mxu0 %v1870
    %1914 = vmatpush.bf16.msra.mxu0 %v1869
    %1915 = vmatmul.bf16.gmra.mxu0 %v1760
    %v1916 = vpop.f32.mrf.mxu0
    %v1917 = vadd.f32 %v1903, %v1916
    %v1918 = vpop.f32.mrf.mxu0
    %v1919 = vadd.f32 %v1905, %v1918
    %1920 = vdwg.mxu0
    %v1921 = vtanh.pop %v1917
    %v1922 = vtanh.pop %v1919
    %v1923 = vld [vmem:[#allocation15] sm:$0xf]
    %v1924 = vld [vmem:[#allocation15 + $0x4] sm:$0xf]
    %v1925 = vld [vmem:[#allocation15 + $0x8] sm:$0xf]
    %v1926 = vld [vmem:[#allocation15 + $0xc] sm:$0xf]
    %v1927 = vld [vmem:[#allocation15 + $0x10] sm:$0xf]
    %v1928 = vld [vmem:[#allocation15 + $0x14] sm:$0xf]
    %v1929 = vld [vmem:[#allocation15 + $0x18] sm:$0xf]
    %v1930 = vld [vmem:[#allocation15 + $0x1c] sm:$0xf]
    %v1931 = vld [vmem:[#allocation15 + $0x20] sm:$0xf]
    %v1932 = vld [vmem:[#allocation15 + $0x24] sm:$0xf]
    %v1933 = vld [vmem:[#allocation15 + $0x28] sm:$0xf]
    %v1934 = vld [vmem:[#allocation15 + $0x2c] sm:$0xf]
    %v1935 = vld [vmem:[#allocation15 + $0x30] sm:$0xf]
    %v1936 = vld [vmem:[#allocation15 + $0x34] sm:$0xf]
    %v1937 = vld [vmem:[#allocation15 + $0x38] sm:$0xf]
    %v1938 = vld [vmem:[#allocation15 + $0x3c] sm:$0xf]
    %v1939 = vld [vmem:[%s11] sm:$0x1]
    %v1940 = vpack.c.bf16 %v1922, %v1921
    %v1942 = vperm.slane %v1939, 0
    %v1960 = vunpack.c.l.b16 %v1923
    %v1961 = vunpack.c.l.b16 %v1924
    %v1962 = vunpack.c.l.b16 %v1925
    %v1963 = vunpack.c.l.b16 %v1926
    %v1964 = vunpack.c.l.b16 %v1927
    %v1965 = vunpack.c.l.b16 %v1928
    %v1966 = vunpack.c.l.b16 %v1929
    %v1967 = vunpack.c.l.b16 %v1930
    %v1968 = vunpack.c.l.b16 %v1931
    %v1969 = vunpack.c.l.b16 %v1932
    %v1970 = vunpack.c.l.b16 %v1933
    %v1971 = vunpack.c.l.b16 %v1934
    %v1972 = vunpack.c.l.b16 %v1935
    %v1973 = vunpack.c.l.b16 %v1936
    %v1974 = vunpack.c.l.b16 %v1937
    %v1975 = vunpack.c.l.b16 %v1938
    %v1976 = vpack.c.b16 %v1961, %v1960
    %v1977 = vpack.c.b16 %v1963, %v1962
    %v1978 = vpack.c.b16 %v1965, %v1964
    %v1979 = vpack.c.b16 %v1967, %v1966
    %v1980 = vpack.c.b16 %v1969, %v1968
    %v1981 = vpack.c.b16 %v1971, %v1970
    %v1982 = vpack.c.b16 %v1973, %v1972
    %v1983 = vpack.c.b16 %v1975, %v1974
    %1992 = vmatpush.bf16.msra.mxu0 %v1983
    %1993 = vmatpush.bf16.msra.mxu0 %v1982
    %1994 = vmatpush.bf16.msra.mxu0 %v1981
    %1995 = vmatpush.bf16.msra.mxu0 %v1980
    %1996 = vmatpush.bf16.msra.mxu0 %v1979
    %1997 = vmatpush.bf16.msra.mxu0 %v1978
    %1998 = vmatpush.bf16.msra.mxu0 %v1977
    %1999 = vmatpush.bf16.msra.mxu0 %v1976
    %2000 = vmatmul.bf16.gmra.mxu0 %v1940
    %v2001 = vpop.f32.mrf.mxu0
    %v2002 = vadd.f32 %v1942, %v2001
    %v2003 = vpop.f32.mrf.mxu0
    %v2004 = vadd.f32 %v1942, %v2003
    %2005 = vdwg.mxu0
    %v2006 = vtanh.pop %v2002
    %v2007 = vtanh.pop %v2004
    %v2008 = vpack.c.bf16 %v2007, %v2006
    %2009 = vmatpush.bf16.msra.mxu0 %v1983
    %2010 = vmatpush.bf16.msra.mxu0 %v1982
    %2011 = vmatpush.bf16.msra.mxu0 %v1981
    %2012 = vmatpush.bf16.msra.mxu0 %v1980
    %2013 = vmatpush.bf16.msra.mxu0 %v1979
    %2014 = vmatpush.bf16.msra.mxu0 %v1978
    %2015 = vmatpush.bf16.msra.mxu0 %v1977
    %2016 = vmatpush.bf16.msra.mxu0 %v1976
    %2017 = vmatmul.bf16.gmra.mxu0 %v2008
    %v2018 = vpop.f32.mrf.mxu0
    %v2019 = vadd.f32 %v1942, %v2018
    %v2020 = vpop.f32.mrf.mxu0
    %v2021 = vadd.f32 %v1942, %v2020
    %2022 = vdwg.mxu0
    %v2023 = vtanh.pop %v2019
    %v2024 = vtanh.pop %v2021
    %v2025 = vpack.c.bf16 %v2024, %v2023
    %v2026 = vld [vmem:[#allocation17] sm:$0xf]
    %v2027 = vld [vmem:[#allocation17 + $0x4] sm:$0xf]
    %v2028 = vld [vmem:[#allocation17 + $0x8] sm:$0xf]
    %v2029 = vld [vmem:[#allocation17 + $0xc] sm:$0xf]
    %v2030 = vld [vmem:[#allocation17 + $0x10] sm:$0xf]
    %v2031 = vld [vmem:[#allocation17 + $0x14] sm:$0xf]
    %v2032 = vld [vmem:[#allocation17 + $0x18] sm:$0xf]
    %v2033 = vld [vmem:[#allocation17 + $0x1c] sm:$0xf]
    %v2034 = vld [vmem:[#allocation17 + $0x20] sm:$0xf]
    %v2035 = vld [vmem:[#allocation17 + $0x24] sm:$0xf]
    %v2036 = vld [vmem:[#allocation17 + $0x28] sm:$0xf]
    %v2037 = vld [vmem:[#allocation17 + $0x2c] sm:$0xf]
    %v2038 = vld [vmem:[#allocation17 + $0x30] sm:$0xf]
    %v2039 = vld [vmem:[#allocation17 + $0x34] sm:$0xf]
    %v2040 = vld [vmem:[#allocation17 + $0x38] sm:$0xf]
    %v2041 = vld [vmem:[#allocation17 + $0x3c] sm:$0xf]
    %v2042 = vld [vmem:[%s13] sm:$0x1]
    %v2044 = vperm.slane %v2042, 0
    %v2062 = vunpack.c.l.b16 %v2026
    %v2063 = vunpack.c.l.b16 %v2027
    %v2064 = vunpack.c.l.b16 %v2028
    %v2065 = vunpack.c.l.b16 %v2029
    %v2066 = vunpack.c.l.b16 %v2030
    %v2067 = vunpack.c.l.b16 %v2031
    %v2068 = vunpack.c.l.b16 %v2032
    %v2069 = vunpack.c.l.b16 %v2033
    %v2070 = vunpack.c.l.b16 %v2034
    %v2071 = vunpack.c.l.b16 %v2035
    %v2072 = vunpack.c.l.b16 %v2036
    %v2073 = vunpack.c.l.b16 %v2037
    %v2074 = vunpack.c.l.b16 %v2038
    %v2075 = vunpack.c.l.b16 %v2039
    %v2076 = vunpack.c.l.b16 %v2040
    %v2077 = vunpack.c.l.b16 %v2041
    %v2078 = vpack.c.b16 %v2063, %v2062
    %v2079 = vpack.c.b16 %v2065, %v2064
    %v2080 = vpack.c.b16 %v2067, %v2066
    %v2081 = vpack.c.b16 %v2069, %v2068
    %v2082 = vpack.c.b16 %v2071, %v2070
    %v2083 = vpack.c.b16 %v2073, %v2072
    %v2084 = vpack.c.b16 %v2075, %v2074
    %v2085 = vpack.c.b16 %v2077, %v2076
    %2094 = vmatpush.bf16.msra.mxu0 %v2085
    %2095 = vmatpush.bf16.msra.mxu0 %v2084
    %2096 = vmatpush.bf16.msra.mxu0 %v2083
    %2097 = vmatpush.bf16.msra.mxu0 %v2082
    %2098 = vmatpush.bf16.msra.mxu0 %v2081
    %2099 = vmatpush.bf16.msra.mxu0 %v2080
    %2100 = vmatpush.bf16.msra.mxu0 %v2079
    %2101 = vmatpush.bf16.msra.mxu0 %v2078
    %2102 = vmatmul.bf16.gmra.mxu0 %v2025
    %v2103 = vpop.f32.mrf.mxu0
    %v2104 = vadd.f32 %v2044, %v2103
    %v2105 = vpop.f32.mrf.mxu0
    %v2106 = vadd.f32 %v2044, %v2105
    %2107 = vdwg.mxu0
    %2108 = vst [vmem:[#allocation18] sm:$0xff] %v2104
    %2109 = vst [vmem:[#allocation18 + $0x8] sm:$0xff] %v2106
    // Predicated region
    $region94: #{tpu_custom_call.1} parent=1 // pred_check
      _
    $region95: #{tpu_custom_call.1} parent=1 // pred_check_branch
      %2111 = sbr.rel (0) target = $region97
    $region96: #{tpu_custom_call.1} parent=1 // pred_region
      %2113 = vsyncadd [#allocation5], 0
      %s2114 = sshll.u32 [#allocation18], 4
      %s2115 = int_to_ptr.vmem [resolvable:$true] %s2114
      %s2116 = sshll.u32 %s14, 4
      %s2117 = int_to_ptr.hbm [resolvable:$true] %s2116
      %2122 = dma.vmem_to_hbm [thread:$0]  %s2115, 256, %s2117, [#allocation5], 128, 128, 8
    $region97: #{tpu_custom_call.1} parent=1 // pred_fallthru
      _
    // Predicated region
    $region98: #{tpu_custom_call.1} parent=1 // pred_check
      _
    $region99: #{tpu_custom_call.1} parent=1 // pred_check_branch
      %2124 = sbr.rel (0) target = $region101
    $region100: #{tpu_custom_call.1} parent=1 // pred_region
      %2126 = dma.done [#allocation5], 256
    $region101: #{tpu_custom_call.1} parent=1 // pred_fallthru
      _
    %2127 = vsyncpa [#allocation4], 1
    %2128 = vsyncpa [#allocation7], 1
    %2129 = vsyncpa [#allocation10], 1
    %2130 = vsyncpa [#allocation13], 1
    %2131 = vsyncpa [#allocation16], 1
    %2132 = vsyncpa [#allocation5], 1

</llo_original>
